<compile_context>
chip_gen: v5e
topology: v5e:2x2
jax: 0.10.0
libtpu: 0.0.40
codegen_flags: <defaults>
</compile_context>

<pallas_src>
import jax
import jax.numpy as jnp
from jax.experimental import pallas as pl
from jax.experimental.pallas import tpu as pltpu

# ----------------------------- model config ---------------------------------
NUM_INPUTS = 16
NUM_HIDDEN = 32
NUM_OUTPUTS = 8
NUM_LAYERS = 4          # -> 4 hidden (Linear+Synaptic) pairs + 1 output pair
THRESHOLD_LIF = 1.0
BETA_LIF = 0.8          # alpha == beta == BETA_LIF (random_learning=False)
BATCH = 2
TIMESTEP = 8

NUM_PAIRS = NUM_LAYERS + 1  # 5 Linear+Synaptic pairs total
PAIR_DIMS = ([(NUM_INPUTS, NUM_HIDDEN)]
             + [(NUM_HIDDEN, NUM_HIDDEN)] * (NUM_LAYERS - 1)
             + [(NUM_HIDDEN, NUM_OUTPUTS)])
MAX_W = NUM_HIDDEN          # uniform padded feature width inside the kernel (32)


# ------------------------------- kernel -------------------------------------
def snn_synaptic_kernel(data_ref, w_ref, v_ref, out_ref):
    """Entire forward pass in one invocation (no grid).

    data_ref : (T, B, MAX_W)          inputs zero-padded to MAX_W features
    w_ref    : (NUM_PAIRS*MAX_W, MAX_W) per-pair weights (in,out), zero padded
    v_ref    : (NUM_PAIRS*4, MAX_W)   rows per pair: b, clip(alpha), clip(beta), threshold
    out_ref  : (T, B, NUM_OUTPUTS)    spike record
    """
    T, B, _ = data_ref.shape

    # ---- hoisted, loop-invariant parameter loads + broadcasts (done once) ----
    ws, bs, als, bes, ths = [], [], [], [], []
    for p in range(NUM_PAIRS):
        ws.append(w_ref[p * MAX_W:(p + 1) * MAX_W, :])                       # (MAX_W, MAX_W)
        bs.append(jnp.broadcast_to(v_ref[4 * p + 0:4 * p + 1, :], (B, MAX_W)))
        als.append(jnp.broadcast_to(v_ref[4 * p + 1:4 * p + 2, :], (B, MAX_W)))
        bes.append(jnp.broadcast_to(v_ref[4 * p + 2:4 * p + 3, :], (B, MAX_W)))
        ths.append(jnp.broadcast_to(v_ref[4 * p + 3:4 * p + 4, :], (B, MAX_W)))

    # zero initial states (reset_mem), carried as values across the unrolled loop
    syn = [jnp.zeros((B, MAX_W), jnp.float32) for _ in range(NUM_PAIRS)]
    mem = [jnp.zeros((B, MAX_W), jnp.float32) for _ in range(NUM_PAIRS)]

    # ---- fully-unrolled time loop (T is small and static) ----
    for t in range(T):
        x = data_ref[t]                                                      # (B, MAX_W)
        for p in range(NUM_PAIRS):
            cur = jnp.dot(x, ws[p], preferred_element_type=jnp.float32) + bs[p]
            reset = (mem[p] - ths[p] > 0.0).astype(jnp.float32)              # from mem_prev
            syn[p] = als[p] * syn[p] + cur
            mem[p] = bes[p] * mem[p] + syn[p] - reset * ths[p]
            x = (mem[p] - ths[p] > 0.0).astype(jnp.float32)                  # spike
        out_ref[t] = x[:, :NUM_OUTPUTS]    # VMEM store; single HBM writeback at end


# ------------------------------ wrapper --------------------------------------
def _pack_params(params):
    """Pack 25 small parameter tensors into two lane-padded VMEM slabs.

    Padding is inert: data is zero-padded on the input features (matching zero
    weight rows), the output pair's extra weight columns / biases are zero and
    its padded threshold rows are 1.0, so padded lanes never spike and are
    sliced off before the output write.
    """
    w_rows, v_rows = [], []
    for (fan_in, fan_out), p in zip(PAIR_DIMS, params):
        w = jnp.zeros((MAX_W, MAX_W), jnp.float32)
        w = w.at[:fan_in, :fan_out].set(jnp.asarray(p["w"], jnp.float32))
        w_rows.append(w)

        def _pad_row(v, fill):
            row = jnp.full((1, MAX_W), fill, jnp.float32)
            return row.at[0, :fan_out].set(jnp.asarray(v, jnp.float32).reshape(-1))

        v_rows.append(_pad_row(p["b"], 0.0))
        v_rows.append(_pad_row(jnp.clip(p["alpha"], 0.0, 1.0), 0.0))  # clip hoisted here
        v_rows.append(_pad_row(jnp.clip(p["beta"], 0.0, 1.0), 0.0))
        v_rows.append(_pad_row(p["threshold"], 1.0))
    return jnp.concatenate(w_rows, axis=0), jnp.concatenate(v_rows, axis=0)


@jax.jit
def rdl_snn_synaptic_forward(data, params):
    """data: (T, B, NUM_INPUTS) f32.
    params: list of NUM_PAIRS dicts with keys w (in,out), b (out,), alpha (out,),
            beta (out,), threshold (out,).
    Returns spk_rec: (T, B, NUM_OUTPUTS) f32."""
    T, B, I = data.shape
    assert I == NUM_INPUTS

    w_slab, v_slab = _pack_params(params)
    data_pad = jnp.zeros((T, B, MAX_W), jnp.float32).at[..., :I].set(data)

    return pl.pallas_call(
        snn_synaptic_kernel,
        out_shape=jax.ShapeDtypeStruct((T, B, NUM_OUTPUTS), jnp.float32),
        in_specs=[
            pl.BlockSpec(memory_space=pltpu.MemorySpace.VMEM),   # data (whole array)
            pl.BlockSpec(memory_space=pltpu.MemorySpace.VMEM),   # weight slab
            pl.BlockSpec(memory_space=pltpu.MemorySpace.VMEM),   # vector-param slab
        ],
        out_specs=pl.BlockSpec(memory_space=pltpu.MemorySpace.VMEM),
    )(data_pad, w_slab, v_slab)


# --------------------------- parameter init ----------------------------------
def init_params(key):
    """PyTorch-style uniform(-1/sqrt(fan_in), 1/sqrt(fan_in)) Linear init;
    alpha/beta/threshold constant-filled (random_learning=False)."""
    params = []
    for (fan_in, fan_out) in PAIR_DIMS:
        key, kw, kb = jax.random.split(key, 3)
        bound = 1.0 / (fan_in ** 0.5)
        params.append(dict(
            w=jax.random.uniform(kw, (fan_in, fan_out), jnp.float32, -bound, bound),
            b=jax.random.uniform(kb, (fan_out,), jnp.float32, -bound, bound),
            alpha=jnp.full((fan_out,), BETA_LIF, jnp.float32),
            beta=jnp.full((fan_out,), BETA_LIF, jnp.float32),
            threshold=jnp.full((fan_out,), THRESHOLD_LIF, jnp.float32),
        ))
    return params


# ---------------------------- pure-JAX reference ------------------------------
def ref_forward(data, params):
    T, B, _ = data.shape
    syn = [jnp.zeros((B, fo), jnp.float32) for (_, fo) in PAIR_DIMS]
    mem = [jnp.zeros((B, fo), jnp.float32) for (_, fo) in PAIR_DIMS]
    outs = []
    for t in range(T):
        x = data[t]
        for p, prm in enumerate(params):
            cur = jnp.dot(x, prm["w"], precision=jax.lax.Precision.HIGHEST) + prm["b"]
            thr = prm["threshold"]
            reset = (mem[p] - thr > 0.0).astype(jnp.float32)
            syn[p] = jnp.clip(prm["alpha"], 0.0, 1.0) * syn[p] + cur
            mem[p] = jnp.clip(prm["beta"], 0.0, 1.0) * mem[p] + syn[p] - reset * thr
            x = (mem[p] - thr > 0.0).astype(jnp.float32)
        outs.append(x)
    return jnp.stack(outs)


# --------------------------------- main ---------------------------------------
if __name__ == "__main__":
    key = jax.random.PRNGKey(0)
    key, kdata = jax.random.split(key)
    # data: [timestep, batch, num_inputs]
    data = jax.random.normal(kdata, (TIMESTEP, BATCH, NUM_INPUTS), jnp.float32)
    params = init_params(key)

    spk_rec = jax.block_until_ready(rdl_snn_synaptic_forward(data, params))

    assert spk_rec.shape == (TIMESTEP, BATCH, NUM_OUTPUTS)
    assert bool(jnp.all(jnp.isfinite(spk_rec)))
    # spikes are binary by construction
    assert bool(jnp.all((spk_rec == 0.0) | (spk_rec == 1.0)))

    # agreement with pure-JAX reference (tolerant to rare borderline threshold flips)
    ref = ref_forward(data, params)
    mismatch_frac = float(jnp.mean(jnp.abs(spk_rec - ref)))
    assert mismatch_frac < 0.05, f"spike mismatch fraction too high: {mismatch_frac}"

    print("KERNEL_OK")
</pallas_src>

<mosaic_0001>
module attributes {stable_mosaic.version = 11 : i64} {
  func.func @snn_synaptic_kernel(%arg0: memref<8x2x32xf32, #tpu.memory_space<vmem>>, %arg1: memref<160x32xf32, #tpu.memory_space<vmem>>, %arg2: memref<20x32xf32, #tpu.memory_space<vmem>>, %arg3: memref<8x2x8xf32, #tpu.memory_space<vmem>>) attributes {dimension_semantics = [], scalar_prefetch = 0 : i64, scratch_operands = 0 : i64, tpu.core_type = #tpu.core_type<tc>} {
    %c0 = arith.constant 0 : index
    %c0_0 = arith.constant 0 : index
    %0 = vector.load %arg1[%c0, %c0_0] : memref<160x32xf32, #tpu.memory_space<vmem>>, vector<32x32xf32>
    %c0_1 = arith.constant 0 : index
    %c0_2 = arith.constant 0 : index
    %1 = vector.load %arg2[%c0_1, %c0_2] : memref<20x32xf32, #tpu.memory_space<vmem>>, vector<1x32xf32>
    %2 = vector.shape_cast %1 : vector<1x32xf32> to vector<1x32xf32>
    %3 = vector.broadcast %2 : vector<1x32xf32> to vector<2x32xf32>
    %c1 = arith.constant 1 : index
    %c0_3 = arith.constant 0 : index
    %4 = vector.load %arg2[%c1, %c0_3] : memref<20x32xf32, #tpu.memory_space<vmem>>, vector<1x32xf32>
    %5 = vector.shape_cast %4 : vector<1x32xf32> to vector<1x32xf32>
    %6 = vector.broadcast %5 : vector<1x32xf32> to vector<2x32xf32>
    %c2 = arith.constant 2 : index
    %c0_4 = arith.constant 0 : index
    %7 = vector.load %arg2[%c2, %c0_4] : memref<20x32xf32, #tpu.memory_space<vmem>>, vector<1x32xf32>
    %8 = vector.shape_cast %7 : vector<1x32xf32> to vector<1x32xf32>
    %9 = vector.broadcast %8 : vector<1x32xf32> to vector<2x32xf32>
    %c3 = arith.constant 3 : index
    %c0_5 = arith.constant 0 : index
    %10 = vector.load %arg2[%c3, %c0_5] : memref<20x32xf32, #tpu.memory_space<vmem>>, vector<1x32xf32>
    %11 = vector.shape_cast %10 : vector<1x32xf32> to vector<1x32xf32>
    %12 = vector.broadcast %11 : vector<1x32xf32> to vector<2x32xf32>
    %c32 = arith.constant 32 : index
    %c0_6 = arith.constant 0 : index
    %13 = vector.load %arg1[%c32, %c0_6] : memref<160x32xf32, #tpu.memory_space<vmem>>, vector<32x32xf32>
    %c4 = arith.constant 4 : index
    %c0_7 = arith.constant 0 : index
    %14 = vector.load %arg2[%c4, %c0_7] : memref<20x32xf32, #tpu.memory_space<vmem>>, vector<1x32xf32>
    %15 = vector.shape_cast %14 : vector<1x32xf32> to vector<1x32xf32>
    %16 = vector.broadcast %15 : vector<1x32xf32> to vector<2x32xf32>
    %c5 = arith.constant 5 : index
    %c0_8 = arith.constant 0 : index
    %17 = vector.load %arg2[%c5, %c0_8] : memref<20x32xf32, #tpu.memory_space<vmem>>, vector<1x32xf32>
    %18 = vector.shape_cast %17 : vector<1x32xf32> to vector<1x32xf32>
    %19 = vector.broadcast %18 : vector<1x32xf32> to vector<2x32xf32>
    %c6 = arith.constant 6 : index
    %c0_9 = arith.constant 0 : index
    %20 = vector.load %arg2[%c6, %c0_9] : memref<20x32xf32, #tpu.memory_space<vmem>>, vector<1x32xf32>
    %21 = vector.shape_cast %20 : vector<1x32xf32> to vector<1x32xf32>
    %22 = vector.broadcast %21 : vector<1x32xf32> to vector<2x32xf32>
    %c7 = arith.constant 7 : index
    %c0_10 = arith.constant 0 : index
    %23 = vector.load %arg2[%c7, %c0_10] : memref<20x32xf32, #tpu.memory_space<vmem>>, vector<1x32xf32>
    %24 = vector.shape_cast %23 : vector<1x32xf32> to vector<1x32xf32>
    %25 = vector.broadcast %24 : vector<1x32xf32> to vector<2x32xf32>
    %c64 = arith.constant 64 : index
    %c0_11 = arith.constant 0 : index
    %26 = vector.load %arg1[%c64, %c0_11] : memref<160x32xf32, #tpu.memory_space<vmem>>, vector<32x32xf32>
    %c8 = arith.constant 8 : index
    %c0_12 = arith.constant 0 : index
    %27 = vector.load %arg2[%c8, %c0_12] : memref<20x32xf32, #tpu.memory_space<vmem>>, vector<1x32xf32>
    %28 = vector.shape_cast %27 : vector<1x32xf32> to vector<1x32xf32>
    %29 = vector.broadcast %28 : vector<1x32xf32> to vector<2x32xf32>
    %c9 = arith.constant 9 : index
    %c0_13 = arith.constant 0 : index
    %30 = vector.load %arg2[%c9, %c0_13] : memref<20x32xf32, #tpu.memory_space<vmem>>, vector<1x32xf32>
    %31 = vector.shape_cast %30 : vector<1x32xf32> to vector<1x32xf32>
    %32 = vector.broadcast %31 : vector<1x32xf32> to vector<2x32xf32>
    %c10 = arith.constant 10 : index
    %c0_14 = arith.constant 0 : index
    %33 = vector.load %arg2[%c10, %c0_14] : memref<20x32xf32, #tpu.memory_space<vmem>>, vector<1x32xf32>
    %34 = vector.shape_cast %33 : vector<1x32xf32> to vector<1x32xf32>
    %35 = vector.broadcast %34 : vector<1x32xf32> to vector<2x32xf32>
    %c11 = arith.constant 11 : index
    %c0_15 = arith.constant 0 : index
    %36 = vector.load %arg2[%c11, %c0_15] : memref<20x32xf32, #tpu.memory_space<vmem>>, vector<1x32xf32>
    %37 = vector.shape_cast %36 : vector<1x32xf32> to vector<1x32xf32>
    %38 = vector.broadcast %37 : vector<1x32xf32> to vector<2x32xf32>
    %c96 = arith.constant 96 : index
    %c0_16 = arith.constant 0 : index
    %39 = vector.load %arg1[%c96, %c0_16] : memref<160x32xf32, #tpu.memory_space<vmem>>, vector<32x32xf32>
    %c12 = arith.constant 12 : index
    %c0_17 = arith.constant 0 : index
    %40 = vector.load %arg2[%c12, %c0_17] : memref<20x32xf32, #tpu.memory_space<vmem>>, vector<1x32xf32>
    %41 = vector.shape_cast %40 : vector<1x32xf32> to vector<1x32xf32>
    %42 = vector.broadcast %41 : vector<1x32xf32> to vector<2x32xf32>
    %c13 = arith.constant 13 : index
    %c0_18 = arith.constant 0 : index
    %43 = vector.load %arg2[%c13, %c0_18] : memref<20x32xf32, #tpu.memory_space<vmem>>, vector<1x32xf32>
    %44 = vector.shape_cast %43 : vector<1x32xf32> to vector<1x32xf32>
    %45 = vector.broadcast %44 : vector<1x32xf32> to vector<2x32xf32>
    %c14 = arith.constant 14 : index
    %c0_19 = arith.constant 0 : index
    %46 = vector.load %arg2[%c14, %c0_19] : memref<20x32xf32, #tpu.memory_space<vmem>>, vector<1x32xf32>
    %47 = vector.shape_cast %46 : vector<1x32xf32> to vector<1x32xf32>
    %48 = vector.broadcast %47 : vector<1x32xf32> to vector<2x32xf32>
    %c15 = arith.constant 15 : index
    %c0_20 = arith.constant 0 : index
    %49 = vector.load %arg2[%c15, %c0_20] : memref<20x32xf32, #tpu.memory_space<vmem>>, vector<1x32xf32>
    %50 = vector.shape_cast %49 : vector<1x32xf32> to vector<1x32xf32>
    %51 = vector.broadcast %50 : vector<1x32xf32> to vector<2x32xf32>
    %c128 = arith.constant 128 : index
    %c0_21 = arith.constant 0 : index
    %52 = vector.load %arg1[%c128, %c0_21] : memref<160x32xf32, #tpu.memory_space<vmem>>, vector<32x32xf32>
    %c16 = arith.constant 16 : index
    %c0_22 = arith.constant 0 : index
    %53 = vector.load %arg2[%c16, %c0_22] : memref<20x32xf32, #tpu.memory_space<vmem>>, vector<1x32xf32>
    %54 = vector.shape_cast %53 : vector<1x32xf32> to vector<1x32xf32>
    %55 = vector.broadcast %54 : vector<1x32xf32> to vector<2x32xf32>
    %c17 = arith.constant 17 : index
    %c0_23 = arith.constant 0 : index
    %56 = vector.load %arg2[%c17, %c0_23] : memref<20x32xf32, #tpu.memory_space<vmem>>, vector<1x32xf32>
    %57 = vector.shape_cast %56 : vector<1x32xf32> to vector<1x32xf32>
    %58 = vector.broadcast %57 : vector<1x32xf32> to vector<2x32xf32>
    %c18 = arith.constant 18 : index
    %c0_24 = arith.constant 0 : index
    %59 = vector.load %arg2[%c18, %c0_24] : memref<20x32xf32, #tpu.memory_space<vmem>>, vector<1x32xf32>
    %60 = vector.shape_cast %59 : vector<1x32xf32> to vector<1x32xf32>
    %61 = vector.broadcast %60 : vector<1x32xf32> to vector<2x32xf32>
    %c19 = arith.constant 19 : index
    %c0_25 = arith.constant 0 : index
    %62 = vector.load %arg2[%c19, %c0_25] : memref<20x32xf32, #tpu.memory_space<vmem>>, vector<1x32xf32>
    %63 = vector.shape_cast %62 : vector<1x32xf32> to vector<1x32xf32>
    %64 = vector.broadcast %63 : vector<1x32xf32> to vector<2x32xf32>
    %cst = arith.constant 0.000000e+00 : f32
    %65 = vector.broadcast %cst : f32 to vector<2x32xf32>
    %cst_26 = arith.constant 0.000000e+00 : f32
    %66 = vector.broadcast %cst_26 : f32 to vector<2x32xf32>
    %cst_27 = arith.constant 0.000000e+00 : f32
    %67 = vector.broadcast %cst_27 : f32 to vector<2x32xf32>
    %cst_28 = arith.constant 0.000000e+00 : f32
    %68 = vector.broadcast %cst_28 : f32 to vector<2x32xf32>
    %cst_29 = arith.constant 0.000000e+00 : f32
    %69 = vector.broadcast %cst_29 : f32 to vector<2x32xf32>
    %cst_30 = arith.constant 0.000000e+00 : f32
    %70 = vector.broadcast %cst_30 : f32 to vector<2x32xf32>
    %cst_31 = arith.constant 0.000000e+00 : f32
    %71 = vector.broadcast %cst_31 : f32 to vector<2x32xf32>
    %cst_32 = arith.constant 0.000000e+00 : f32
    %72 = vector.broadcast %cst_32 : f32 to vector<2x32xf32>
    %cst_33 = arith.constant 0.000000e+00 : f32
    %73 = vector.broadcast %cst_33 : f32 to vector<2x32xf32>
    %cst_34 = arith.constant 0.000000e+00 : f32
    %74 = vector.broadcast %cst_34 : f32 to vector<2x32xf32>
    %c0_35 = arith.constant 0 : index
    %c0_36 = arith.constant 0 : index
    %c0_37 = arith.constant 0 : index
    %75 = vector.load %arg0[%c0_35, %c0_36, %c0_37] : memref<8x2x32xf32, #tpu.memory_space<vmem>>, vector<1x2x32xf32>
    %76 = vector.shape_cast %75 : vector<1x2x32xf32> to vector<2x32xf32>
    %cst_38 = arith.constant dense<0.000000e+00> : vector<2x32xf32>
    %77 = tpu.matmul %76, %0, %cst_38 {dimension_numbers = #tpu.dot_dimension_numbers<[1], [0], [0], [1], [0, 0, 1, 1], [], []>} : vector<2x32xf32>, vector<32x32xf32>, vector<2x32xf32> -> vector<2x32xf32>
    %78 = arith.addf %77, %3 : vector<2x32xf32>
    %79 = arith.subf %70, %12 : vector<2x32xf32>
    %cst_39 = arith.constant 0.000000e+00 : f32
    %80 = vector.broadcast %cst_39 : f32 to vector<2x32xf32>
    %81 = arith.cmpf ogt, %79, %80 : vector<2x32xf32>
    %82 = arith.extui %81 : vector<2x32xi1> to vector<2x32xi32>
    %83 = arith.sitofp %82 : vector<2x32xi32> to vector<2x32xf32>
    %84 = arith.mulf %6, %65 : vector<2x32xf32>
    %85 = arith.addf %84, %78 : vector<2x32xf32>
    %86 = arith.mulf %9, %70 : vector<2x32xf32>
    %87 = arith.addf %86, %85 : vector<2x32xf32>
    %88 = arith.mulf %83, %12 : vector<2x32xf32>
    %89 = arith.subf %87, %88 : vector<2x32xf32>
    %90 = arith.subf %89, %12 : vector<2x32xf32>
    %cst_40 = arith.constant 0.000000e+00 : f32
    %91 = vector.broadcast %cst_40 : f32 to vector<2x32xf32>
    %92 = arith.cmpf ogt, %90, %91 : vector<2x32xf32>
    %93 = arith.extui %92 : vector<2x32xi1> to vector<2x32xi32>
    %94 = arith.sitofp %93 : vector<2x32xi32> to vector<2x32xf32>
    %cst_41 = arith.constant dense<0.000000e+00> : vector<2x32xf32>
    %95 = tpu.matmul %94, %13, %cst_41 {dimension_numbers = #tpu.dot_dimension_numbers<[1], [0], [0], [1], [0, 0, 1, 1], [], []>} : vector<2x32xf32>, vector<32x32xf32>, vector<2x32xf32> -> vector<2x32xf32>
    %96 = arith.addf %95, %16 : vector<2x32xf32>
    %97 = arith.subf %71, %25 : vector<2x32xf32>
    %cst_42 = arith.constant 0.000000e+00 : f32
    %98 = vector.broadcast %cst_42 : f32 to vector<2x32xf32>
    %99 = arith.cmpf ogt, %97, %98 : vector<2x32xf32>
    %100 = arith.extui %99 : vector<2x32xi1> to vector<2x32xi32>
    %101 = arith.sitofp %100 : vector<2x32xi32> to vector<2x32xf32>
    %102 = arith.mulf %19, %66 : vector<2x32xf32>
    %103 = arith.addf %102, %96 : vector<2x32xf32>
    %104 = arith.mulf %22, %71 : vector<2x32xf32>
    %105 = arith.addf %104, %103 : vector<2x32xf32>
    %106 = arith.mulf %101, %25 : vector<2x32xf32>
    %107 = arith.subf %105, %106 : vector<2x32xf32>
    %108 = arith.subf %107, %25 : vector<2x32xf32>
    %cst_43 = arith.constant 0.000000e+00 : f32
    %109 = vector.broadcast %cst_43 : f32 to vector<2x32xf32>
    %110 = arith.cmpf ogt, %108, %109 : vector<2x32xf32>
    %111 = arith.extui %110 : vector<2x32xi1> to vector<2x32xi32>
    %112 = arith.sitofp %111 : vector<2x32xi32> to vector<2x32xf32>
    %cst_44 = arith.constant dense<0.000000e+00> : vector<2x32xf32>
    %113 = tpu.matmul %112, %26, %cst_44 {dimension_numbers = #tpu.dot_dimension_numbers<[1], [0], [0], [1], [0, 0, 1, 1], [], []>} : vector<2x32xf32>, vector<32x32xf32>, vector<2x32xf32> -> vector<2x32xf32>
    %114 = arith.addf %113, %29 : vector<2x32xf32>
    %115 = arith.subf %72, %38 : vector<2x32xf32>
    %cst_45 = arith.constant 0.000000e+00 : f32
    %116 = vector.broadcast %cst_45 : f32 to vector<2x32xf32>
    %117 = arith.cmpf ogt, %115, %116 : vector<2x32xf32>
    %118 = arith.extui %117 : vector<2x32xi1> to vector<2x32xi32>
    %119 = arith.sitofp %118 : vector<2x32xi32> to vector<2x32xf32>
    %120 = arith.mulf %32, %67 : vector<2x32xf32>
    %121 = arith.addf %120, %114 : vector<2x32xf32>
    %122 = arith.mulf %35, %72 : vector<2x32xf32>
    %123 = arith.addf %122, %121 : vector<2x32xf32>
    %124 = arith.mulf %119, %38 : vector<2x32xf32>
    %125 = arith.subf %123, %124 : vector<2x32xf32>
    %126 = arith.subf %125, %38 : vector<2x32xf32>
    %cst_46 = arith.constant 0.000000e+00 : f32
    %127 = vector.broadcast %cst_46 : f32 to vector<2x32xf32>
    %128 = arith.cmpf ogt, %126, %127 : vector<2x32xf32>
    %129 = arith.extui %128 : vector<2x32xi1> to vector<2x32xi32>
    %130 = arith.sitofp %129 : vector<2x32xi32> to vector<2x32xf32>
    %cst_47 = arith.constant dense<0.000000e+00> : vector<2x32xf32>
    %131 = tpu.matmul %130, %39, %cst_47 {dimension_numbers = #tpu.dot_dimension_numbers<[1], [0], [0], [1], [0, 0, 1, 1], [], []>} : vector<2x32xf32>, vector<32x32xf32>, vector<2x32xf32> -> vector<2x32xf32>
    %132 = arith.addf %131, %42 : vector<2x32xf32>
    %133 = arith.subf %73, %51 : vector<2x32xf32>
    %cst_48 = arith.constant 0.000000e+00 : f32
    %134 = vector.broadcast %cst_48 : f32 to vector<2x32xf32>
    %135 = arith.cmpf ogt, %133, %134 : vector<2x32xf32>
    %136 = arith.extui %135 : vector<2x32xi1> to vector<2x32xi32>
    %137 = arith.sitofp %136 : vector<2x32xi32> to vector<2x32xf32>
    %138 = arith.mulf %45, %68 : vector<2x32xf32>
    %139 = arith.addf %138, %132 : vector<2x32xf32>
    %140 = arith.mulf %48, %73 : vector<2x32xf32>
    %141 = arith.addf %140, %139 : vector<2x32xf32>
    %142 = arith.mulf %137, %51 : vector<2x32xf32>
    %143 = arith.subf %141, %142 : vector<2x32xf32>
    %144 = arith.subf %143, %51 : vector<2x32xf32>
    %cst_49 = arith.constant 0.000000e+00 : f32
    %145 = vector.broadcast %cst_49 : f32 to vector<2x32xf32>
    %146 = arith.cmpf ogt, %144, %145 : vector<2x32xf32>
    %147 = arith.extui %146 : vector<2x32xi1> to vector<2x32xi32>
    %148 = arith.sitofp %147 : vector<2x32xi32> to vector<2x32xf32>
    %cst_50 = arith.constant dense<0.000000e+00> : vector<2x32xf32>
    %149 = tpu.matmul %148, %52, %cst_50 {dimension_numbers = #tpu.dot_dimension_numbers<[1], [0], [0], [1], [0, 0, 1, 1], [], []>} : vector<2x32xf32>, vector<32x32xf32>, vector<2x32xf32> -> vector<2x32xf32>
    %150 = arith.addf %149, %55 : vector<2x32xf32>
    %151 = arith.subf %74, %64 : vector<2x32xf32>
    %cst_51 = arith.constant 0.000000e+00 : f32
    %152 = vector.broadcast %cst_51 : f32 to vector<2x32xf32>
    %153 = arith.cmpf ogt, %151, %152 : vector<2x32xf32>
    %154 = arith.extui %153 : vector<2x32xi1> to vector<2x32xi32>
    %155 = arith.sitofp %154 : vector<2x32xi32> to vector<2x32xf32>
    %156 = arith.mulf %58, %69 : vector<2x32xf32>
    %157 = arith.addf %156, %150 : vector<2x32xf32>
    %158 = arith.mulf %61, %74 : vector<2x32xf32>
    %159 = arith.addf %158, %157 : vector<2x32xf32>
    %160 = arith.mulf %155, %64 : vector<2x32xf32>
    %161 = arith.subf %159, %160 : vector<2x32xf32>
    %162 = arith.subf %161, %64 : vector<2x32xf32>
    %cst_52 = arith.constant 0.000000e+00 : f32
    %163 = vector.broadcast %cst_52 : f32 to vector<2x32xf32>
    %164 = arith.cmpf ogt, %162, %163 : vector<2x32xf32>
    %165 = arith.extui %164 : vector<2x32xi1> to vector<2x32xi32>
    %166 = arith.sitofp %165 : vector<2x32xi32> to vector<2x32xf32>
    %167 = vector.extract_strided_slice %166 {offsets = [0, 0], sizes = [2, 8], strides = [1, 1]} : vector<2x32xf32> to vector<2x8xf32>
    %c0_53 = arith.constant 0 : index
    %c0_54 = arith.constant 0 : index
    %c0_55 = arith.constant 0 : index
    %168 = vector.load %arg3[%c0_53, %c0_54, %c0_55] : memref<8x2x8xf32, #tpu.memory_space<vmem>>, vector<1x2x8xf32>
    %169 = vector.shape_cast %168 : vector<1x2x8xf32> to vector<2x8xf32>
    %170 = vector.shape_cast %167 : vector<2x8xf32> to vector<1x2x8xf32>
    tpu.vector_store %arg3[%c0_53, %c0_54, %c0_55], %170 {strides = array<i32>} : memref<8x2x8xf32, #tpu.memory_space<vmem>>, vector<1x2x8xf32>,
    %c1_56 = arith.constant 1 : index
    %c0_57 = arith.constant 0 : index
    %c0_58 = arith.constant 0 : index
    %171 = vector.load %arg0[%c1_56, %c0_57, %c0_58] : memref<8x2x32xf32, #tpu.memory_space<vmem>>, vector<1x2x32xf32>
    %172 = vector.shape_cast %171 : vector<1x2x32xf32> to vector<2x32xf32>
    %cst_59 = arith.constant dense<0.000000e+00> : vector<2x32xf32>
    %173 = tpu.matmul %172, %0, %cst_59 {dimension_numbers = #tpu.dot_dimension_numbers<[1], [0], [0], [1], [0, 0, 1, 1], [], []>} : vector<2x32xf32>, vector<32x32xf32>, vector<2x32xf32> -> vector<2x32xf32>
    %174 = arith.addf %173, %3 : vector<2x32xf32>
    %175 = arith.subf %89, %12 : vector<2x32xf32>
    %cst_60 = arith.constant 0.000000e+00 : f32
    %176 = vector.broadcast %cst_60 : f32 to vector<2x32xf32>
    %177 = arith.cmpf ogt, %175, %176 : vector<2x32xf32>
    %178 = arith.extui %177 : vector<2x32xi1> to vector<2x32xi32>
    %179 = arith.sitofp %178 : vector<2x32xi32> to vector<2x32xf32>
    %180 = arith.mulf %6, %85 : vector<2x32xf32>
    %181 = arith.addf %180, %174 : vector<2x32xf32>
    %182 = arith.mulf %9, %89 : vector<2x32xf32>
    %183 = arith.addf %182, %181 : vector<2x32xf32>
    %184 = arith.mulf %179, %12 : vector<2x32xf32>
    %185 = arith.subf %183, %184 : vector<2x32xf32>
    %186 = arith.subf %185, %12 : vector<2x32xf32>
    %cst_61 = arith.constant 0.000000e+00 : f32
    %187 = vector.broadcast %cst_61 : f32 to vector<2x32xf32>
    %188 = arith.cmpf ogt, %186, %187 : vector<2x32xf32>
    %189 = arith.extui %188 : vector<2x32xi1> to vector<2x32xi32>
    %190 = arith.sitofp %189 : vector<2x32xi32> to vector<2x32xf32>
    %cst_62 = arith.constant dense<0.000000e+00> : vector<2x32xf32>
    %191 = tpu.matmul %190, %13, %cst_62 {dimension_numbers = #tpu.dot_dimension_numbers<[1], [0], [0], [1], [0, 0, 1, 1], [], []>} : vector<2x32xf32>, vector<32x32xf32>, vector<2x32xf32> -> vector<2x32xf32>
    %192 = arith.addf %191, %16 : vector<2x32xf32>
    %193 = arith.subf %107, %25 : vector<2x32xf32>
    %cst_63 = arith.constant 0.000000e+00 : f32
    %194 = vector.broadcast %cst_63 : f32 to vector<2x32xf32>
    %195 = arith.cmpf ogt, %193, %194 : vector<2x32xf32>
    %196 = arith.extui %195 : vector<2x32xi1> to vector<2x32xi32>
    %197 = arith.sitofp %196 : vector<2x32xi32> to vector<2x32xf32>
    %198 = arith.mulf %19, %103 : vector<2x32xf32>
    %199 = arith.addf %198, %192 : vector<2x32xf32>
    %200 = arith.mulf %22, %107 : vector<2x32xf32>
    %201 = arith.addf %200, %199 : vector<2x32xf32>
    %202 = arith.mulf %197, %25 : vector<2x32xf32>
    %203 = arith.subf %201, %202 : vector<2x32xf32>
    %204 = arith.subf %203, %25 : vector<2x32xf32>
    %cst_64 = arith.constant 0.000000e+00 : f32
    %205 = vector.broadcast %cst_64 : f32 to vector<2x32xf32>
    %206 = arith.cmpf ogt, %204, %205 : vector<2x32xf32>
    %207 = arith.extui %206 : vector<2x32xi1> to vector<2x32xi32>
    %208 = arith.sitofp %207 : vector<2x32xi32> to vector<2x32xf32>
    %cst_65 = arith.constant dense<0.000000e+00> : vector<2x32xf32>
    %209 = tpu.matmul %208, %26, %cst_65 {dimension_numbers = #tpu.dot_dimension_numbers<[1], [0], [0], [1], [0, 0, 1, 1], [], []>} : vector<2x32xf32>, vector<32x32xf32>, vector<2x32xf32> -> vector<2x32xf32>
    %210 = arith.addf %209, %29 : vector<2x32xf32>
    %211 = arith.subf %125, %38 : vector<2x32xf32>
    %cst_66 = arith.constant 0.000000e+00 : f32
    %212 = vector.broadcast %cst_66 : f32 to vector<2x32xf32>
    %213 = arith.cmpf ogt, %211, %212 : vector<2x32xf32>
    %214 = arith.extui %213 : vector<2x32xi1> to vector<2x32xi32>
    %215 = arith.sitofp %214 : vector<2x32xi32> to vector<2x32xf32>
    %216 = arith.mulf %32, %121 : vector<2x32xf32>
    %217 = arith.addf %216, %210 : vector<2x32xf32>
    %218 = arith.mulf %35, %125 : vector<2x32xf32>
    %219 = arith.addf %218, %217 : vector<2x32xf32>
    %220 = arith.mulf %215, %38 : vector<2x32xf32>
    %221 = arith.subf %219, %220 : vector<2x32xf32>
    %222 = arith.subf %221, %38 : vector<2x32xf32>
    %cst_67 = arith.constant 0.000000e+00 : f32
    %223 = vector.broadcast %cst_67 : f32 to vector<2x32xf32>
    %224 = arith.cmpf ogt, %222, %223 : vector<2x32xf32>
    %225 = arith.extui %224 : vector<2x32xi1> to vector<2x32xi32>
    %226 = arith.sitofp %225 : vector<2x32xi32> to vector<2x32xf32>
    %cst_68 = arith.constant dense<0.000000e+00> : vector<2x32xf32>
    %227 = tpu.matmul %226, %39, %cst_68 {dimension_numbers = #tpu.dot_dimension_numbers<[1], [0], [0], [1], [0, 0, 1, 1], [], []>} : vector<2x32xf32>, vector<32x32xf32>, vector<2x32xf32> -> vector<2x32xf32>
    %228 = arith.addf %227, %42 : vector<2x32xf32>
    %229 = arith.subf %143, %51 : vector<2x32xf32>
    %cst_69 = arith.constant 0.000000e+00 : f32
    %230 = vector.broadcast %cst_69 : f32 to vector<2x32xf32>
    %231 = arith.cmpf ogt, %229, %230 : vector<2x32xf32>
    %232 = arith.extui %231 : vector<2x32xi1> to vector<2x32xi32>
    %233 = arith.sitofp %232 : vector<2x32xi32> to vector<2x32xf32>
    %234 = arith.mulf %45, %139 : vector<2x32xf32>
    %235 = arith.addf %234, %228 : vector<2x32xf32>
    %236 = arith.mulf %48, %143 : vector<2x32xf32>
    %237 = arith.addf %236, %235 : vector<2x32xf32>
    %238 = arith.mulf %233, %51 : vector<2x32xf32>
    %239 = arith.subf %237, %238 : vector<2x32xf32>
    %240 = arith.subf %239, %51 : vector<2x32xf32>
    %cst_70 = arith.constant 0.000000e+00 : f32
    %241 = vector.broadcast %cst_70 : f32 to vector<2x32xf32>
    %242 = arith.cmpf ogt, %240, %241 : vector<2x32xf32>
    %243 = arith.extui %242 : vector<2x32xi1> to vector<2x32xi32>
    %244 = arith.sitofp %243 : vector<2x32xi32> to vector<2x32xf32>
    %cst_71 = arith.constant dense<0.000000e+00> : vector<2x32xf32>
    %245 = tpu.matmul %244, %52, %cst_71 {dimension_numbers = #tpu.dot_dimension_numbers<[1], [0], [0], [1], [0, 0, 1, 1], [], []>} : vector<2x32xf32>, vector<32x32xf32>, vector<2x32xf32> -> vector<2x32xf32>
    %246 = arith.addf %245, %55 : vector<2x32xf32>
    %247 = arith.subf %161, %64 : vector<2x32xf32>
    %cst_72 = arith.constant 0.000000e+00 : f32
    %248 = vector.broadcast %cst_72 : f32 to vector<2x32xf32>
    %249 = arith.cmpf ogt, %247, %248 : vector<2x32xf32>
    %250 = arith.extui %249 : vector<2x32xi1> to vector<2x32xi32>
    %251 = arith.sitofp %250 : vector<2x32xi32> to vector<2x32xf32>
    %252 = arith.mulf %58, %157 : vector<2x32xf32>
    %253 = arith.addf %252, %246 : vector<2x32xf32>
    %254 = arith.mulf %61, %161 : vector<2x32xf32>
    %255 = arith.addf %254, %253 : vector<2x32xf32>
    %256 = arith.mulf %251, %64 : vector<2x32xf32>
    %257 = arith.subf %255, %256 : vector<2x32xf32>
    %258 = arith.subf %257, %64 : vector<2x32xf32>
    %cst_73 = arith.constant 0.000000e+00 : f32
    %259 = vector.broadcast %cst_73 : f32 to vector<2x32xf32>
    %260 = arith.cmpf ogt, %258, %259 : vector<2x32xf32>
    %261 = arith.extui %260 : vector<2x32xi1> to vector<2x32xi32>
    %262 = arith.sitofp %261 : vector<2x32xi32> to vector<2x32xf32>
    %263 = vector.extract_strided_slice %262 {offsets = [0, 0], sizes = [2, 8], strides = [1, 1]} : vector<2x32xf32> to vector<2x8xf32>
    %c1_74 = arith.constant 1 : index
    %c0_75 = arith.constant 0 : index
    %c0_76 = arith.constant 0 : index
    %264 = vector.load %arg3[%c1_74, %c0_75, %c0_76] : memref<8x2x8xf32, #tpu.memory_space<vmem>>, vector<1x2x8xf32>
    %265 = vector.shape_cast %264 : vector<1x2x8xf32> to vector<2x8xf32>
    %266 = vector.shape_cast %263 : vector<2x8xf32> to vector<1x2x8xf32>
    tpu.vector_store %arg3[%c1_74, %c0_75, %c0_76], %266 {strides = array<i32>} : memref<8x2x8xf32, #tpu.memory_space<vmem>>, vector<1x2x8xf32>,
    %c2_77 = arith.constant 2 : index
    %c0_78 = arith.constant 0 : index
    %c0_79 = arith.constant 0 : index
    %267 = vector.load %arg0[%c2_77, %c0_78, %c0_79] : memref<8x2x32xf32, #tpu.memory_space<vmem>>, vector<1x2x32xf32>
    %268 = vector.shape_cast %267 : vector<1x2x32xf32> to vector<2x32xf32>
    %cst_80 = arith.constant dense<0.000000e+00> : vector<2x32xf32>
    %269 = tpu.matmul %268, %0, %cst_80 {dimension_numbers = #tpu.dot_dimension_numbers<[1], [0], [0], [1], [0, 0, 1, 1], [], []>} : vector<2x32xf32>, vector<32x32xf32>, vector<2x32xf32> -> vector<2x32xf32>
    %270 = arith.addf %269, %3 : vector<2x32xf32>
    %271 = arith.subf %185, %12 : vector<2x32xf32>
    %cst_81 = arith.constant 0.000000e+00 : f32
    %272 = vector.broadcast %cst_81 : f32 to vector<2x32xf32>
    %273 = arith.cmpf ogt, %271, %272 : vector<2x32xf32>
    %274 = arith.extui %273 : vector<2x32xi1> to vector<2x32xi32>
    %275 = arith.sitofp %274 : vector<2x32xi32> to vector<2x32xf32>
    %276 = arith.mulf %6, %181 : vector<2x32xf32>
    %277 = arith.addf %276, %270 : vector<2x32xf32>
    %278 = arith.mulf %9, %185 : vector<2x32xf32>
    %279 = arith.addf %278, %277 : vector<2x32xf32>
    %280 = arith.mulf %275, %12 : vector<2x32xf32>
    %281 = arith.subf %279, %280 : vector<2x32xf32>
    %282 = arith.subf %281, %12 : vector<2x32xf32>
    %cst_82 = arith.constant 0.000000e+00 : f32
    %283 = vector.broadcast %cst_82 : f32 to vector<2x32xf32>
    %284 = arith.cmpf ogt, %282, %283 : vector<2x32xf32>
    %285 = arith.extui %284 : vector<2x32xi1> to vector<2x32xi32>
    %286 = arith.sitofp %285 : vector<2x32xi32> to vector<2x32xf32>
    %cst_83 = arith.constant dense<0.000000e+00> : vector<2x32xf32>
    %287 = tpu.matmul %286, %13, %cst_83 {dimension_numbers = #tpu.dot_dimension_numbers<[1], [0], [0], [1], [0, 0, 1, 1], [], []>} : vector<2x32xf32>, vector<32x32xf32>, vector<2x32xf32> -> vector<2x32xf32>
    %288 = arith.addf %287, %16 : vector<2x32xf32>
    %289 = arith.subf %203, %25 : vector<2x32xf32>
    %cst_84 = arith.constant 0.000000e+00 : f32
    %290 = vector.broadcast %cst_84 : f32 to vector<2x32xf32>
    %291 = arith.cmpf ogt, %289, %290 : vector<2x32xf32>
    %292 = arith.extui %291 : vector<2x32xi1> to vector<2x32xi32>
    %293 = arith.sitofp %292 : vector<2x32xi32> to vector<2x32xf32>
    %294 = arith.mulf %19, %199 : vector<2x32xf32>
    %295 = arith.addf %294, %288 : vector<2x32xf32>
    %296 = arith.mulf %22, %203 : vector<2x32xf32>
    %297 = arith.addf %296, %295 : vector<2x32xf32>
    %298 = arith.mulf %293, %25 : vector<2x32xf32>
    %299 = arith.subf %297, %298 : vector<2x32xf32>
    %300 = arith.subf %299, %25 : vector<2x32xf32>
    %cst_85 = arith.constant 0.000000e+00 : f32
    %301 = vector.broadcast %cst_85 : f32 to vector<2x32xf32>
    %302 = arith.cmpf ogt, %300, %301 : vector<2x32xf32>
    %303 = arith.extui %302 : vector<2x32xi1> to vector<2x32xi32>
    %304 = arith.sitofp %303 : vector<2x32xi32> to vector<2x32xf32>
    %cst_86 = arith.constant dense<0.000000e+00> : vector<2x32xf32>
    %305 = tpu.matmul %304, %26, %cst_86 {dimension_numbers = #tpu.dot_dimension_numbers<[1], [0], [0], [1], [0, 0, 1, 1], [], []>} : vector<2x32xf32>, vector<32x32xf32>, vector<2x32xf32> -> vector<2x32xf32>
    %306 = arith.addf %305, %29 : vector<2x32xf32>
    %307 = arith.subf %221, %38 : vector<2x32xf32>
    %cst_87 = arith.constant 0.000000e+00 : f32
    %308 = vector.broadcast %cst_87 : f32 to vector<2x32xf32>
    %309 = arith.cmpf ogt, %307, %308 : vector<2x32xf32>
    %310 = arith.extui %309 : vector<2x32xi1> to vector<2x32xi32>
    %311 = arith.sitofp %310 : vector<2x32xi32> to vector<2x32xf32>
    %312 = arith.mulf %32, %217 : vector<2x32xf32>
    %313 = arith.addf %312, %306 : vector<2x32xf32>
    %314 = arith.mulf %35, %221 : vector<2x32xf32>
    %315 = arith.addf %314, %313 : vector<2x32xf32>
    %316 = arith.mulf %311, %38 : vector<2x32xf32>
    %317 = arith.subf %315, %316 : vector<2x32xf32>
    %318 = arith.subf %317, %38 : vector<2x32xf32>
    %cst_88 = arith.constant 0.000000e+00 : f32
    %319 = vector.broadcast %cst_88 : f32 to vector<2x32xf32>
    %320 = arith.cmpf ogt, %318, %319 : vector<2x32xf32>
    %321 = arith.extui %320 : vector<2x32xi1> to vector<2x32xi32>
    %322 = arith.sitofp %321 : vector<2x32xi32> to vector<2x32xf32>
    %cst_89 = arith.constant dense<0.000000e+00> : vector<2x32xf32>
    %323 = tpu.matmul %322, %39, %cst_89 {dimension_numbers = #tpu.dot_dimension_numbers<[1], [0], [0], [1], [0, 0, 1, 1], [], []>} : vector<2x32xf32>, vector<32x32xf32>, vector<2x32xf32> -> vector<2x32xf32>
    %324 = arith.addf %323, %42 : vector<2x32xf32>
    %325 = arith.subf %239, %51 : vector<2x32xf32>
    %cst_90 = arith.constant 0.000000e+00 : f32
    %326 = vector.broadcast %cst_90 : f32 to vector<2x32xf32>
    %327 = arith.cmpf ogt, %325, %326 : vector<2x32xf32>
    %328 = arith.extui %327 : vector<2x32xi1> to vector<2x32xi32>
    %329 = arith.sitofp %328 : vector<2x32xi32> to vector<2x32xf32>
    %330 = arith.mulf %45, %235 : vector<2x32xf32>
    %331 = arith.addf %330, %324 : vector<2x32xf32>
    %332 = arith.mulf %48, %239 : vector<2x32xf32>
    %333 = arith.addf %332, %331 : vector<2x32xf32>
    %334 = arith.mulf %329, %51 : vector<2x32xf32>
    %335 = arith.subf %333, %334 : vector<2x32xf32>
    %336 = arith.subf %335, %51 : vector<2x32xf32>
    %cst_91 = arith.constant 0.000000e+00 : f32
    %337 = vector.broadcast %cst_91 : f32 to vector<2x32xf32>
    %338 = arith.cmpf ogt, %336, %337 : vector<2x32xf32>
    %339 = arith.extui %338 : vector<2x32xi1> to vector<2x32xi32>
    %340 = arith.sitofp %339 : vector<2x32xi32> to vector<2x32xf32>
    %cst_92 = arith.constant dense<0.000000e+00> : vector<2x32xf32>
    %341 = tpu.matmul %340, %52, %cst_92 {dimension_numbers = #tpu.dot_dimension_numbers<[1], [0], [0], [1], [0, 0, 1, 1], [], []>} : vector<2x32xf32>, vector<32x32xf32>, vector<2x32xf32> -> vector<2x32xf32>
    %342 = arith.addf %341, %55 : vector<2x32xf32>
    %343 = arith.subf %257, %64 : vector<2x32xf32>
    %cst_93 = arith.constant 0.000000e+00 : f32
    %344 = vector.broadcast %cst_93 : f32 to vector<2x32xf32>
    %345 = arith.cmpf ogt, %343, %344 : vector<2x32xf32>
    %346 = arith.extui %345 : vector<2x32xi1> to vector<2x32xi32>
    %347 = arith.sitofp %346 : vector<2x32xi32> to vector<2x32xf32>
    %348 = arith.mulf %58, %253 : vector<2x32xf32>
    %349 = arith.addf %348, %342 : vector<2x32xf32>
    %350 = arith.mulf %61, %257 : vector<2x32xf32>
    %351 = arith.addf %350, %349 : vector<2x32xf32>
    %352 = arith.mulf %347, %64 : vector<2x32xf32>
    %353 = arith.subf %351, %352 : vector<2x32xf32>
    %354 = arith.subf %353, %64 : vector<2x32xf32>
    %cst_94 = arith.constant 0.000000e+00 : f32
    %355 = vector.broadcast %cst_94 : f32 to vector<2x32xf32>
    %356 = arith.cmpf ogt, %354, %355 : vector<2x32xf32>
    %357 = arith.extui %356 : vector<2x32xi1> to vector<2x32xi32>
    %358 = arith.sitofp %357 : vector<2x32xi32> to vector<2x32xf32>
    %359 = vector.extract_strided_slice %358 {offsets = [0, 0], sizes = [2, 8], strides = [1, 1]} : vector<2x32xf32> to vector<2x8xf32>
    %c2_95 = arith.constant 2 : index
    %c0_96 = arith.constant 0 : index
    %c0_97 = arith.constant 0 : index
    %360 = vector.load %arg3[%c2_95, %c0_96, %c0_97] : memref<8x2x8xf32, #tpu.memory_space<vmem>>, vector<1x2x8xf32>
    %361 = vector.shape_cast %360 : vector<1x2x8xf32> to vector<2x8xf32>
    %362 = vector.shape_cast %359 : vector<2x8xf32> to vector<1x2x8xf32>
    tpu.vector_store %arg3[%c2_95, %c0_96, %c0_97], %362 {strides = array<i32>} : memref<8x2x8xf32, #tpu.memory_space<vmem>>, vector<1x2x8xf32>,
    %c3_98 = arith.constant 3 : index
    %c0_99 = arith.constant 0 : index
    %c0_100 = arith.constant 0 : index
    %363 = vector.load %arg0[%c3_98, %c0_99, %c0_100] : memref<8x2x32xf32, #tpu.memory_space<vmem>>, vector<1x2x32xf32>
    %364 = vector.shape_cast %363 : vector<1x2x32xf32> to vector<2x32xf32>
    %cst_101 = arith.constant dense<0.000000e+00> : vector<2x32xf32>
    %365 = tpu.matmul %364, %0, %cst_101 {dimension_numbers = #tpu.dot_dimension_numbers<[1], [0], [0], [1], [0, 0, 1, 1], [], []>} : vector<2x32xf32>, vector<32x32xf32>, vector<2x32xf32> -> vector<2x32xf32>
    %366 = arith.addf %365, %3 : vector<2x32xf32>
    %367 = arith.subf %281, %12 : vector<2x32xf32>
    %cst_102 = arith.constant 0.000000e+00 : f32
    %368 = vector.broadcast %cst_102 : f32 to vector<2x32xf32>
    %369 = arith.cmpf ogt, %367, %368 : vector<2x32xf32>
    %370 = arith.extui %369 : vector<2x32xi1> to vector<2x32xi32>
    %371 = arith.sitofp %370 : vector<2x32xi32> to vector<2x32xf32>
    %372 = arith.mulf %6, %277 : vector<2x32xf32>
    %373 = arith.addf %372, %366 : vector<2x32xf32>
    %374 = arith.mulf %9, %281 : vector<2x32xf32>
    %375 = arith.addf %374, %373 : vector<2x32xf32>
    %376 = arith.mulf %371, %12 : vector<2x32xf32>
    %377 = arith.subf %375, %376 : vector<2x32xf32>
    %378 = arith.subf %377, %12 : vector<2x32xf32>
    %cst_103 = arith.constant 0.000000e+00 : f32
    %379 = vector.broadcast %cst_103 : f32 to vector<2x32xf32>
    %380 = arith.cmpf ogt, %378, %379 : vector<2x32xf32>
    %381 = arith.extui %380 : vector<2x32xi1> to vector<2x32xi32>
    %382 = arith.sitofp %381 : vector<2x32xi32> to vector<2x32xf32>
    %cst_104 = arith.constant dense<0.000000e+00> : vector<2x32xf32>
    %383 = tpu.matmul %382, %13, %cst_104 {dimension_numbers = #tpu.dot_dimension_numbers<[1], [0], [0], [1], [0, 0, 1, 1], [], []>} : vector<2x32xf32>, vector<32x32xf32>, vector<2x32xf32> -> vector<2x32xf32>
    %384 = arith.addf %383, %16 : vector<2x32xf32>
    %385 = arith.subf %299, %25 : vector<2x32xf32>
    %cst_105 = arith.constant 0.000000e+00 : f32
    %386 = vector.broadcast %cst_105 : f32 to vector<2x32xf32>
    %387 = arith.cmpf ogt, %385, %386 : vector<2x32xf32>
    %388 = arith.extui %387 : vector<2x32xi1> to vector<2x32xi32>
    %389 = arith.sitofp %388 : vector<2x32xi32> to vector<2x32xf32>
    %390 = arith.mulf %19, %295 : vector<2x32xf32>
    %391 = arith.addf %390, %384 : vector<2x32xf32>
    %392 = arith.mulf %22, %299 : vector<2x32xf32>
    %393 = arith.addf %392, %391 : vector<2x32xf32>
    %394 = arith.mulf %389, %25 : vector<2x32xf32>
    %395 = arith.subf %393, %394 : vector<2x32xf32>
    %396 = arith.subf %395, %25 : vector<2x32xf32>
    %cst_106 = arith.constant 0.000000e+00 : f32
    %397 = vector.broadcast %cst_106 : f32 to vector<2x32xf32>
    %398 = arith.cmpf ogt, %396, %397 : vector<2x32xf32>
    %399 = arith.extui %398 : vector<2x32xi1> to vector<2x32xi32>
    %400 = arith.sitofp %399 : vector<2x32xi32> to vector<2x32xf32>
    %cst_107 = arith.constant dense<0.000000e+00> : vector<2x32xf32>
    %401 = tpu.matmul %400, %26, %cst_107 {dimension_numbers = #tpu.dot_dimension_numbers<[1], [0], [0], [1], [0, 0, 1, 1], [], []>} : vector<2x32xf32>, vector<32x32xf32>, vector<2x32xf32> -> vector<2x32xf32>
    %402 = arith.addf %401, %29 : vector<2x32xf32>
    %403 = arith.subf %317, %38 : vector<2x32xf32>
    %cst_108 = arith.constant 0.000000e+00 : f32
    %404 = vector.broadcast %cst_108 : f32 to vector<2x32xf32>
    %405 = arith.cmpf ogt, %403, %404 : vector<2x32xf32>
    %406 = arith.extui %405 : vector<2x32xi1> to vector<2x32xi32>
    %407 = arith.sitofp %406 : vector<2x32xi32> to vector<2x32xf32>
    %408 = arith.mulf %32, %313 : vector<2x32xf32>
    %409 = arith.addf %408, %402 : vector<2x32xf32>
    %410 = arith.mulf %35, %317 : vector<2x32xf32>
    %411 = arith.addf %410, %409 : vector<2x32xf32>
    %412 = arith.mulf %407, %38 : vector<2x32xf32>
    %413 = arith.subf %411, %412 : vector<2x32xf32>
    %414 = arith.subf %413, %38 : vector<2x32xf32>
    %cst_109 = arith.constant 0.000000e+00 : f32
    %415 = vector.broadcast %cst_109 : f32 to vector<2x32xf32>
    %416 = arith.cmpf ogt, %414, %415 : vector<2x32xf32>
    %417 = arith.extui %416 : vector<2x32xi1> to vector<2x32xi32>
    %418 = arith.sitofp %417 : vector<2x32xi32> to vector<2x32xf32>
    %cst_110 = arith.constant dense<0.000000e+00> : vector<2x32xf32>
    %419 = tpu.matmul %418, %39, %cst_110 {dimension_numbers = #tpu.dot_dimension_numbers<[1], [0], [0], [1], [0, 0, 1, 1], [], []>} : vector<2x32xf32>, vector<32x32xf32>, vector<2x32xf32> -> vector<2x32xf32>
    %420 = arith.addf %419, %42 : vector<2x32xf32>
    %421 = arith.subf %335, %51 : vector<2x32xf32>
    %cst_111 = arith.constant 0.000000e+00 : f32
    %422 = vector.broadcast %cst_111 : f32 to vector<2x32xf32>
    %423 = arith.cmpf ogt, %421, %422 : vector<2x32xf32>
    %424 = arith.extui %423 : vector<2x32xi1> to vector<2x32xi32>
    %425 = arith.sitofp %424 : vector<2x32xi32> to vector<2x32xf32>
    %426 = arith.mulf %45, %331 : vector<2x32xf32>
    %427 = arith.addf %426, %420 : vector<2x32xf32>
    %428 = arith.mulf %48, %335 : vector<2x32xf32>
    %429 = arith.addf %428, %427 : vector<2x32xf32>
    %430 = arith.mulf %425, %51 : vector<2x32xf32>
    %431 = arith.subf %429, %430 : vector<2x32xf32>
    %432 = arith.subf %431, %51 : vector<2x32xf32>
    %cst_112 = arith.constant 0.000000e+00 : f32
    %433 = vector.broadcast %cst_112 : f32 to vector<2x32xf32>
    %434 = arith.cmpf ogt, %432, %433 : vector<2x32xf32>
    %435 = arith.extui %434 : vector<2x32xi1> to vector<2x32xi32>
    %436 = arith.sitofp %435 : vector<2x32xi32> to vector<2x32xf32>
    %cst_113 = arith.constant dense<0.000000e+00> : vector<2x32xf32>
    %437 = tpu.matmul %436, %52, %cst_113 {dimension_numbers = #tpu.dot_dimension_numbers<[1], [0], [0], [1], [0, 0, 1, 1], [], []>} : vector<2x32xf32>, vector<32x32xf32>, vector<2x32xf32> -> vector<2x32xf32>
    %438 = arith.addf %437, %55 : vector<2x32xf32>
    %439 = arith.subf %353, %64 : vector<2x32xf32>
    %cst_114 = arith.constant 0.000000e+00 : f32
    %440 = vector.broadcast %cst_114 : f32 to vector<2x32xf32>
    %441 = arith.cmpf ogt, %439, %440 : vector<2x32xf32>
    %442 = arith.extui %441 : vector<2x32xi1> to vector<2x32xi32>
    %443 = arith.sitofp %442 : vector<2x32xi32> to vector<2x32xf32>
    %444 = arith.mulf %58, %349 : vector<2x32xf32>
    %445 = arith.addf %444, %438 : vector<2x32xf32>
    %446 = arith.mulf %61, %353 : vector<2x32xf32>
    %447 = arith.addf %446, %445 : vector<2x32xf32>
    %448 = arith.mulf %443, %64 : vector<2x32xf32>
    %449 = arith.subf %447, %448 : vector<2x32xf32>
    %450 = arith.subf %449, %64 : vector<2x32xf32>
    %cst_115 = arith.constant 0.000000e+00 : f32
    %451 = vector.broadcast %cst_115 : f32 to vector<2x32xf32>
    %452 = arith.cmpf ogt, %450, %451 : vector<2x32xf32>
    %453 = arith.extui %452 : vector<2x32xi1> to vector<2x32xi32>
    %454 = arith.sitofp %453 : vector<2x32xi32> to vector<2x32xf32>
    %455 = vector.extract_strided_slice %454 {offsets = [0, 0], sizes = [2, 8], strides = [1, 1]} : vector<2x32xf32> to vector<2x8xf32>
    %c3_116 = arith.constant 3 : index
    %c0_117 = arith.constant 0 : index
    %c0_118 = arith.constant 0 : index
    %456 = vector.load %arg3[%c3_116, %c0_117, %c0_118] : memref<8x2x8xf32, #tpu.memory_space<vmem>>, vector<1x2x8xf32>
    %457 = vector.shape_cast %456 : vector<1x2x8xf32> to vector<2x8xf32>
    %458 = vector.shape_cast %455 : vector<2x8xf32> to vector<1x2x8xf32>
    tpu.vector_store %arg3[%c3_116, %c0_117, %c0_118], %458 {strides = array<i32>} : memref<8x2x8xf32, #tpu.memory_space<vmem>>, vector<1x2x8xf32>,
    %c4_119 = arith.constant 4 : index
    %c0_120 = arith.constant 0 : index
    %c0_121 = arith.constant 0 : index
    %459 = vector.load %arg0[%c4_119, %c0_120, %c0_121] : memref<8x2x32xf32, #tpu.memory_space<vmem>>, vector<1x2x32xf32>
    %460 = vector.shape_cast %459 : vector<1x2x32xf32> to vector<2x32xf32>
    %cst_122 = arith.constant dense<0.000000e+00> : vector<2x32xf32>
    %461 = tpu.matmul %460, %0, %cst_122 {dimension_numbers = #tpu.dot_dimension_numbers<[1], [0], [0], [1], [0, 0, 1, 1], [], []>} : vector<2x32xf32>, vector<32x32xf32>, vector<2x32xf32> -> vector<2x32xf32>
    %462 = arith.addf %461, %3 : vector<2x32xf32>
    %463 = arith.subf %377, %12 : vector<2x32xf32>
    %cst_123 = arith.constant 0.000000e+00 : f32
    %464 = vector.broadcast %cst_123 : f32 to vector<2x32xf32>
    %465 = arith.cmpf ogt, %463, %464 : vector<2x32xf32>
    %466 = arith.extui %465 : vector<2x32xi1> to vector<2x32xi32>
    %467 = arith.sitofp %466 : vector<2x32xi32> to vector<2x32xf32>
    %468 = arith.mulf %6, %373 : vector<2x32xf32>
    %469 = arith.addf %468, %462 : vector<2x32xf32>
    %470 = arith.mulf %9, %377 : vector<2x32xf32>
    %471 = arith.addf %470, %469 : vector<2x32xf32>
    %472 = arith.mulf %467, %12 : vector<2x32xf32>
    %473 = arith.subf %471, %472 : vector<2x32xf32>
    %474 = arith.subf %473, %12 : vector<2x32xf32>
    %cst_124 = arith.constant 0.000000e+00 : f32
    %475 = vector.broadcast %cst_124 : f32 to vector<2x32xf32>
    %476 = arith.cmpf ogt, %474, %475 : vector<2x32xf32>
    %477 = arith.extui %476 : vector<2x32xi1> to vector<2x32xi32>
    %478 = arith.sitofp %477 : vector<2x32xi32> to vector<2x32xf32>
    %cst_125 = arith.constant dense<0.000000e+00> : vector<2x32xf32>
    %479 = tpu.matmul %478, %13, %cst_125 {dimension_numbers = #tpu.dot_dimension_numbers<[1], [0], [0], [1], [0, 0, 1, 1], [], []>} : vector<2x32xf32>, vector<32x32xf32>, vector<2x32xf32> -> vector<2x32xf32>
    %480 = arith.addf %479, %16 : vector<2x32xf32>
    %481 = arith.subf %395, %25 : vector<2x32xf32>
    %cst_126 = arith.constant 0.000000e+00 : f32
    %482 = vector.broadcast %cst_126 : f32 to vector<2x32xf32>
    %483 = arith.cmpf ogt, %481, %482 : vector<2x32xf32>
    %484 = arith.extui %483 : vector<2x32xi1> to vector<2x32xi32>
    %485 = arith.sitofp %484 : vector<2x32xi32> to vector<2x32xf32>
    %486 = arith.mulf %19, %391 : vector<2x32xf32>
    %487 = arith.addf %486, %480 : vector<2x32xf32>
    %488 = arith.mulf %22, %395 : vector<2x32xf32>
    %489 = arith.addf %488, %487 : vector<2x32xf32>
    %490 = arith.mulf %485, %25 : vector<2x32xf32>
    %491 = arith.subf %489, %490 : vector<2x32xf32>
    %492 = arith.subf %491, %25 : vector<2x32xf32>
    %cst_127 = arith.constant 0.000000e+00 : f32
    %493 = vector.broadcast %cst_127 : f32 to vector<2x32xf32>
    %494 = arith.cmpf ogt, %492, %493 : vector<2x32xf32>
    %495 = arith.extui %494 : vector<2x32xi1> to vector<2x32xi32>
    %496 = arith.sitofp %495 : vector<2x32xi32> to vector<2x32xf32>
    %cst_128 = arith.constant dense<0.000000e+00> : vector<2x32xf32>
    %497 = tpu.matmul %496, %26, %cst_128 {dimension_numbers = #tpu.dot_dimension_numbers<[1], [0], [0], [1], [0, 0, 1, 1], [], []>} : vector<2x32xf32>, vector<32x32xf32>, vector<2x32xf32> -> vector<2x32xf32>
    %498 = arith.addf %497, %29 : vector<2x32xf32>
    %499 = arith.subf %413, %38 : vector<2x32xf32>
    %cst_129 = arith.constant 0.000000e+00 : f32
    %500 = vector.broadcast %cst_129 : f32 to vector<2x32xf32>
    %501 = arith.cmpf ogt, %499, %500 : vector<2x32xf32>
    %502 = arith.extui %501 : vector<2x32xi1> to vector<2x32xi32>
    %503 = arith.sitofp %502 : vector<2x32xi32> to vector<2x32xf32>
    %504 = arith.mulf %32, %409 : vector<2x32xf32>
    %505 = arith.addf %504, %498 : vector<2x32xf32>
    %506 = arith.mulf %35, %413 : vector<2x32xf32>
    %507 = arith.addf %506, %505 : vector<2x32xf32>
    %508 = arith.mulf %503, %38 : vector<2x32xf32>
    %509 = arith.subf %507, %508 : vector<2x32xf32>
    %510 = arith.subf %509, %38 : vector<2x32xf32>
    %cst_130 = arith.constant 0.000000e+00 : f32
    %511 = vector.broadcast %cst_130 : f32 to vector<2x32xf32>
    %512 = arith.cmpf ogt, %510, %511 : vector<2x32xf32>
    %513 = arith.extui %512 : vector<2x32xi1> to vector<2x32xi32>
    %514 = arith.sitofp %513 : vector<2x32xi32> to vector<2x32xf32>
    %cst_131 = arith.constant dense<0.000000e+00> : vector<2x32xf32>
    %515 = tpu.matmul %514, %39, %cst_131 {dimension_numbers = #tpu.dot_dimension_numbers<[1], [0], [0], [1], [0, 0, 1, 1], [], []>} : vector<2x32xf32>, vector<32x32xf32>, vector<2x32xf32> -> vector<2x32xf32>
    %516 = arith.addf %515, %42 : vector<2x32xf32>
    %517 = arith.subf %431, %51 : vector<2x32xf32>
    %cst_132 = arith.constant 0.000000e+00 : f32
    %518 = vector.broadcast %cst_132 : f32 to vector<2x32xf32>
    %519 = arith.cmpf ogt, %517, %518 : vector<2x32xf32>
    %520 = arith.extui %519 : vector<2x32xi1> to vector<2x32xi32>
    %521 = arith.sitofp %520 : vector<2x32xi32> to vector<2x32xf32>
    %522 = arith.mulf %45, %427 : vector<2x32xf32>
    %523 = arith.addf %522, %516 : vector<2x32xf32>
    %524 = arith.mulf %48, %431 : vector<2x32xf32>
    %525 = arith.addf %524, %523 : vector<2x32xf32>
    %526 = arith.mulf %521, %51 : vector<2x32xf32>
    %527 = arith.subf %525, %526 : vector<2x32xf32>
    %528 = arith.subf %527, %51 : vector<2x32xf32>
    %cst_133 = arith.constant 0.000000e+00 : f32
    %529 = vector.broadcast %cst_133 : f32 to vector<2x32xf32>
    %530 = arith.cmpf ogt, %528, %529 : vector<2x32xf32>
    %531 = arith.extui %530 : vector<2x32xi1> to vector<2x32xi32>
    %532 = arith.sitofp %531 : vector<2x32xi32> to vector<2x32xf32>
    %cst_134 = arith.constant dense<0.000000e+00> : vector<2x32xf32>
    %533 = tpu.matmul %532, %52, %cst_134 {dimension_numbers = #tpu.dot_dimension_numbers<[1], [0], [0], [1], [0, 0, 1, 1], [], []>} : vector<2x32xf32>, vector<32x32xf32>, vector<2x32xf32> -> vector<2x32xf32>
    %534 = arith.addf %533, %55 : vector<2x32xf32>
    %535 = arith.subf %449, %64 : vector<2x32xf32>
    %cst_135 = arith.constant 0.000000e+00 : f32
    %536 = vector.broadcast %cst_135 : f32 to vector<2x32xf32>
    %537 = arith.cmpf ogt, %535, %536 : vector<2x32xf32>
    %538 = arith.extui %537 : vector<2x32xi1> to vector<2x32xi32>
    %539 = arith.sitofp %538 : vector<2x32xi32> to vector<2x32xf32>
    %540 = arith.mulf %58, %445 : vector<2x32xf32>
    %541 = arith.addf %540, %534 : vector<2x32xf32>
    %542 = arith.mulf %61, %449 : vector<2x32xf32>
    %543 = arith.addf %542, %541 : vector<2x32xf32>
    %544 = arith.mulf %539, %64 : vector<2x32xf32>
    %545 = arith.subf %543, %544 : vector<2x32xf32>
    %546 = arith.subf %545, %64 : vector<2x32xf32>
    %cst_136 = arith.constant 0.000000e+00 : f32
    %547 = vector.broadcast %cst_136 : f32 to vector<2x32xf32>
    %548 = arith.cmpf ogt, %546, %547 : vector<2x32xf32>
    %549 = arith.extui %548 : vector<2x32xi1> to vector<2x32xi32>
    %550 = arith.sitofp %549 : vector<2x32xi32> to vector<2x32xf32>
    %551 = vector.extract_strided_slice %550 {offsets = [0, 0], sizes = [2, 8], strides = [1, 1]} : vector<2x32xf32> to vector<2x8xf32>
    %c4_137 = arith.constant 4 : index
    %c0_138 = arith.constant 0 : index
    %c0_139 = arith.constant 0 : index
    %552 = vector.load %arg3[%c4_137, %c0_138, %c0_139] : memref<8x2x8xf32, #tpu.memory_space<vmem>>, vector<1x2x8xf32>
    %553 = vector.shape_cast %552 : vector<1x2x8xf32> to vector<2x8xf32>
    %554 = vector.shape_cast %551 : vector<2x8xf32> to vector<1x2x8xf32>
    tpu.vector_store %arg3[%c4_137, %c0_138, %c0_139], %554 {strides = array<i32>} : memref<8x2x8xf32, #tpu.memory_space<vmem>>, vector<1x2x8xf32>,
    %c5_140 = arith.constant 5 : index
    %c0_141 = arith.constant 0 : index
    %c0_142 = arith.constant 0 : index
    %555 = vector.load %arg0[%c5_140, %c0_141, %c0_142] : memref<8x2x32xf32, #tpu.memory_space<vmem>>, vector<1x2x32xf32>
    %556 = vector.shape_cast %555 : vector<1x2x32xf32> to vector<2x32xf32>
    %cst_143 = arith.constant dense<0.000000e+00> : vector<2x32xf32>
    %557 = tpu.matmul %556, %0, %cst_143 {dimension_numbers = #tpu.dot_dimension_numbers<[1], [0], [0], [1], [0, 0, 1, 1], [], []>} : vector<2x32xf32>, vector<32x32xf32>, vector<2x32xf32> -> vector<2x32xf32>
    %558 = arith.addf %557, %3 : vector<2x32xf32>
    %559 = arith.subf %473, %12 : vector<2x32xf32>
    %cst_144 = arith.constant 0.000000e+00 : f32
    %560 = vector.broadcast %cst_144 : f32 to vector<2x32xf32>
    %561 = arith.cmpf ogt, %559, %560 : vector<2x32xf32>
    %562 = arith.extui %561 : vector<2x32xi1> to vector<2x32xi32>
    %563 = arith.sitofp %562 : vector<2x32xi32> to vector<2x32xf32>
    %564 = arith.mulf %6, %469 : vector<2x32xf32>
    %565 = arith.addf %564, %558 : vector<2x32xf32>
    %566 = arith.mulf %9, %473 : vector<2x32xf32>
    %567 = arith.addf %566, %565 : vector<2x32xf32>
    %568 = arith.mulf %563, %12 : vector<2x32xf32>
    %569 = arith.subf %567, %568 : vector<2x32xf32>
    %570 = arith.subf %569, %12 : vector<2x32xf32>
    %cst_145 = arith.constant 0.000000e+00 : f32
    %571 = vector.broadcast %cst_145 : f32 to vector<2x32xf32>
    %572 = arith.cmpf ogt, %570, %571 : vector<2x32xf32>
    %573 = arith.extui %572 : vector<2x32xi1> to vector<2x32xi32>
    %574 = arith.sitofp %573 : vector<2x32xi32> to vector<2x32xf32>
    %cst_146 = arith.constant dense<0.000000e+00> : vector<2x32xf32>
    %575 = tpu.matmul %574, %13, %cst_146 {dimension_numbers = #tpu.dot_dimension_numbers<[1], [0], [0], [1], [0, 0, 1, 1], [], []>} : vector<2x32xf32>, vector<32x32xf32>, vector<2x32xf32> -> vector<2x32xf32>
    %576 = arith.addf %575, %16 : vector<2x32xf32>
    %577 = arith.subf %491, %25 : vector<2x32xf32>
    %cst_147 = arith.constant 0.000000e+00 : f32
    %578 = vector.broadcast %cst_147 : f32 to vector<2x32xf32>
    %579 = arith.cmpf ogt, %577, %578 : vector<2x32xf32>
    %580 = arith.extui %579 : vector<2x32xi1> to vector<2x32xi32>
    %581 = arith.sitofp %580 : vector<2x32xi32> to vector<2x32xf32>
    %582 = arith.mulf %19, %487 : vector<2x32xf32>
    %583 = arith.addf %582, %576 : vector<2x32xf32>
    %584 = arith.mulf %22, %491 : vector<2x32xf32>
    %585 = arith.addf %584, %583 : vector<2x32xf32>
    %586 = arith.mulf %581, %25 : vector<2x32xf32>
    %587 = arith.subf %585, %586 : vector<2x32xf32>
    %588 = arith.subf %587, %25 : vector<2x32xf32>
    %cst_148 = arith.constant 0.000000e+00 : f32
    %589 = vector.broadcast %cst_148 : f32 to vector<2x32xf32>
    %590 = arith.cmpf ogt, %588, %589 : vector<2x32xf32>
    %591 = arith.extui %590 : vector<2x32xi1> to vector<2x32xi32>
    %592 = arith.sitofp %591 : vector<2x32xi32> to vector<2x32xf32>
    %cst_149 = arith.constant dense<0.000000e+00> : vector<2x32xf32>
    %593 = tpu.matmul %592, %26, %cst_149 {dimension_numbers = #tpu.dot_dimension_numbers<[1], [0], [0], [1], [0, 0, 1, 1], [], []>} : vector<2x32xf32>, vector<32x32xf32>, vector<2x32xf32> -> vector<2x32xf32>
    %594 = arith.addf %593, %29 : vector<2x32xf32>
    %595 = arith.subf %509, %38 : vector<2x32xf32>
    %cst_150 = arith.constant 0.000000e+00 : f32
    %596 = vector.broadcast %cst_150 : f32 to vector<2x32xf32>
    %597 = arith.cmpf ogt, %595, %596 : vector<2x32xf32>
    %598 = arith.extui %597 : vector<2x32xi1> to vector<2x32xi32>
    %599 = arith.sitofp %598 : vector<2x32xi32> to vector<2x32xf32>
    %600 = arith.mulf %32, %505 : vector<2x32xf32>
    %601 = arith.addf %600, %594 : vector<2x32xf32>
    %602 = arith.mulf %35, %509 : vector<2x32xf32>
    %603 = arith.addf %602, %601 : vector<2x32xf32>
    %604 = arith.mulf %599, %38 : vector<2x32xf32>
    %605 = arith.subf %603, %604 : vector<2x32xf32>
    %606 = arith.subf %605, %38 : vector<2x32xf32>
    %cst_151 = arith.constant 0.000000e+00 : f32
    %607 = vector.broadcast %cst_151 : f32 to vector<2x32xf32>
    %608 = arith.cmpf ogt, %606, %607 : vector<2x32xf32>
    %609 = arith.extui %608 : vector<2x32xi1> to vector<2x32xi32>
    %610 = arith.sitofp %609 : vector<2x32xi32> to vector<2x32xf32>
    %cst_152 = arith.constant dense<0.000000e+00> : vector<2x32xf32>
    %611 = tpu.matmul %610, %39, %cst_152 {dimension_numbers = #tpu.dot_dimension_numbers<[1], [0], [0], [1], [0, 0, 1, 1], [], []>} : vector<2x32xf32>, vector<32x32xf32>, vector<2x32xf32> -> vector<2x32xf32>
    %612 = arith.addf %611, %42 : vector<2x32xf32>
    %613 = arith.subf %527, %51 : vector<2x32xf32>
    %cst_153 = arith.constant 0.000000e+00 : f32
    %614 = vector.broadcast %cst_153 : f32 to vector<2x32xf32>
    %615 = arith.cmpf ogt, %613, %614 : vector<2x32xf32>
    %616 = arith.extui %615 : vector<2x32xi1> to vector<2x32xi32>
    %617 = arith.sitofp %616 : vector<2x32xi32> to vector<2x32xf32>
    %618 = arith.mulf %45, %523 : vector<2x32xf32>
    %619 = arith.addf %618, %612 : vector<2x32xf32>
    %620 = arith.mulf %48, %527 : vector<2x32xf32>
    %621 = arith.addf %620, %619 : vector<2x32xf32>
    %622 = arith.mulf %617, %51 : vector<2x32xf32>
    %623 = arith.subf %621, %622 : vector<2x32xf32>
    %624 = arith.subf %623, %51 : vector<2x32xf32>
    %cst_154 = arith.constant 0.000000e+00 : f32
    %625 = vector.broadcast %cst_154 : f32 to vector<2x32xf32>
    %626 = arith.cmpf ogt, %624, %625 : vector<2x32xf32>
    %627 = arith.extui %626 : vector<2x32xi1> to vector<2x32xi32>
    %628 = arith.sitofp %627 : vector<2x32xi32> to vector<2x32xf32>
    %cst_155 = arith.constant dense<0.000000e+00> : vector<2x32xf32>
    %629 = tpu.matmul %628, %52, %cst_155 {dimension_numbers = #tpu.dot_dimension_numbers<[1], [0], [0], [1], [0, 0, 1, 1], [], []>} : vector<2x32xf32>, vector<32x32xf32>, vector<2x32xf32> -> vector<2x32xf32>
    %630 = arith.addf %629, %55 : vector<2x32xf32>
    %631 = arith.subf %545, %64 : vector<2x32xf32>
    %cst_156 = arith.constant 0.000000e+00 : f32
    %632 = vector.broadcast %cst_156 : f32 to vector<2x32xf32>
    %633 = arith.cmpf ogt, %631, %632 : vector<2x32xf32>
    %634 = arith.extui %633 : vector<2x32xi1> to vector<2x32xi32>
    %635 = arith.sitofp %634 : vector<2x32xi32> to vector<2x32xf32>
    %636 = arith.mulf %58, %541 : vector<2x32xf32>
    %637 = arith.addf %636, %630 : vector<2x32xf32>
    %638 = arith.mulf %61, %545 : vector<2x32xf32>
    %639 = arith.addf %638, %637 : vector<2x32xf32>
    %640 = arith.mulf %635, %64 : vector<2x32xf32>
    %641 = arith.subf %639, %640 : vector<2x32xf32>
    %642 = arith.subf %641, %64 : vector<2x32xf32>
    %cst_157 = arith.constant 0.000000e+00 : f32
    %643 = vector.broadcast %cst_157 : f32 to vector<2x32xf32>
    %644 = arith.cmpf ogt, %642, %643 : vector<2x32xf32>
    %645 = arith.extui %644 : vector<2x32xi1> to vector<2x32xi32>
    %646 = arith.sitofp %645 : vector<2x32xi32> to vector<2x32xf32>
    %647 = vector.extract_strided_slice %646 {offsets = [0, 0], sizes = [2, 8], strides = [1, 1]} : vector<2x32xf32> to vector<2x8xf32>
    %c5_158 = arith.constant 5 : index
    %c0_159 = arith.constant 0 : index
    %c0_160 = arith.constant 0 : index
    %648 = vector.load %arg3[%c5_158, %c0_159, %c0_160] : memref<8x2x8xf32, #tpu.memory_space<vmem>>, vector<1x2x8xf32>
    %649 = vector.shape_cast %648 : vector<1x2x8xf32> to vector<2x8xf32>
    %650 = vector.shape_cast %647 : vector<2x8xf32> to vector<1x2x8xf32>
    tpu.vector_store %arg3[%c5_158, %c0_159, %c0_160], %650 {strides = array<i32>} : memref<8x2x8xf32, #tpu.memory_space<vmem>>, vector<1x2x8xf32>,
    %c6_161 = arith.constant 6 : index
    %c0_162 = arith.constant 0 : index
    %c0_163 = arith.constant 0 : index
    %651 = vector.load %arg0[%c6_161, %c0_162, %c0_163] : memref<8x2x32xf32, #tpu.memory_space<vmem>>, vector<1x2x32xf32>
    %652 = vector.shape_cast %651 : vector<1x2x32xf32> to vector<2x32xf32>
    %cst_164 = arith.constant dense<0.000000e+00> : vector<2x32xf32>
    %653 = tpu.matmul %652, %0, %cst_164 {dimension_numbers = #tpu.dot_dimension_numbers<[1], [0], [0], [1], [0, 0, 1, 1], [], []>} : vector<2x32xf32>, vector<32x32xf32>, vector<2x32xf32> -> vector<2x32xf32>
    %654 = arith.addf %653, %3 : vector<2x32xf32>
    %655 = arith.subf %569, %12 : vector<2x32xf32>
    %cst_165 = arith.constant 0.000000e+00 : f32
    %656 = vector.broadcast %cst_165 : f32 to vector<2x32xf32>
    %657 = arith.cmpf ogt, %655, %656 : vector<2x32xf32>
    %658 = arith.extui %657 : vector<2x32xi1> to vector<2x32xi32>
    %659 = arith.sitofp %658 : vector<2x32xi32> to vector<2x32xf32>
    %660 = arith.mulf %6, %565 : vector<2x32xf32>
    %661 = arith.addf %660, %654 : vector<2x32xf32>
    %662 = arith.mulf %9, %569 : vector<2x32xf32>
    %663 = arith.addf %662, %661 : vector<2x32xf32>
    %664 = arith.mulf %659, %12 : vector<2x32xf32>
    %665 = arith.subf %663, %664 : vector<2x32xf32>
    %666 = arith.subf %665, %12 : vector<2x32xf32>
    %cst_166 = arith.constant 0.000000e+00 : f32
    %667 = vector.broadcast %cst_166 : f32 to vector<2x32xf32>
    %668 = arith.cmpf ogt, %666, %667 : vector<2x32xf32>
    %669 = arith.extui %668 : vector<2x32xi1> to vector<2x32xi32>
    %670 = arith.sitofp %669 : vector<2x32xi32> to vector<2x32xf32>
    %cst_167 = arith.constant dense<0.000000e+00> : vector<2x32xf32>
    %671 = tpu.matmul %670, %13, %cst_167 {dimension_numbers = #tpu.dot_dimension_numbers<[1], [0], [0], [1], [0, 0, 1, 1], [], []>} : vector<2x32xf32>, vector<32x32xf32>, vector<2x32xf32> -> vector<2x32xf32>
    %672 = arith.addf %671, %16 : vector<2x32xf32>
    %673 = arith.subf %587, %25 : vector<2x32xf32>
    %cst_168 = arith.constant 0.000000e+00 : f32
    %674 = vector.broadcast %cst_168 : f32 to vector<2x32xf32>
    %675 = arith.cmpf ogt, %673, %674 : vector<2x32xf32>
    %676 = arith.extui %675 : vector<2x32xi1> to vector<2x32xi32>
    %677 = arith.sitofp %676 : vector<2x32xi32> to vector<2x32xf32>
    %678 = arith.mulf %19, %583 : vector<2x32xf32>
    %679 = arith.addf %678, %672 : vector<2x32xf32>
    %680 = arith.mulf %22, %587 : vector<2x32xf32>
    %681 = arith.addf %680, %679 : vector<2x32xf32>
    %682 = arith.mulf %677, %25 : vector<2x32xf32>
    %683 = arith.subf %681, %682 : vector<2x32xf32>
    %684 = arith.subf %683, %25 : vector<2x32xf32>
    %cst_169 = arith.constant 0.000000e+00 : f32
    %685 = vector.broadcast %cst_169 : f32 to vector<2x32xf32>
    %686 = arith.cmpf ogt, %684, %685 : vector<2x32xf32>
    %687 = arith.extui %686 : vector<2x32xi1> to vector<2x32xi32>
    %688 = arith.sitofp %687 : vector<2x32xi32> to vector<2x32xf32>
    %cst_170 = arith.constant dense<0.000000e+00> : vector<2x32xf32>
    %689 = tpu.matmul %688, %26, %cst_170 {dimension_numbers = #tpu.dot_dimension_numbers<[1], [0], [0], [1], [0, 0, 1, 1], [], []>} : vector<2x32xf32>, vector<32x32xf32>, vector<2x32xf32> -> vector<2x32xf32>
    %690 = arith.addf %689, %29 : vector<2x32xf32>
    %691 = arith.subf %605, %38 : vector<2x32xf32>
    %cst_171 = arith.constant 0.000000e+00 : f32
    %692 = vector.broadcast %cst_171 : f32 to vector<2x32xf32>
    %693 = arith.cmpf ogt, %691, %692 : vector<2x32xf32>
    %694 = arith.extui %693 : vector<2x32xi1> to vector<2x32xi32>
    %695 = arith.sitofp %694 : vector<2x32xi32> to vector<2x32xf32>
    %696 = arith.mulf %32, %601 : vector<2x32xf32>
    %697 = arith.addf %696, %690 : vector<2x32xf32>
    %698 = arith.mulf %35, %605 : vector<2x32xf32>
    %699 = arith.addf %698, %697 : vector<2x32xf32>
    %700 = arith.mulf %695, %38 : vector<2x32xf32>
    %701 = arith.subf %699, %700 : vector<2x32xf32>
    %702 = arith.subf %701, %38 : vector<2x32xf32>
    %cst_172 = arith.constant 0.000000e+00 : f32
    %703 = vector.broadcast %cst_172 : f32 to vector<2x32xf32>
    %704 = arith.cmpf ogt, %702, %703 : vector<2x32xf32>
    %705 = arith.extui %704 : vector<2x32xi1> to vector<2x32xi32>
    %706 = arith.sitofp %705 : vector<2x32xi32> to vector<2x32xf32>
    %cst_173 = arith.constant dense<0.000000e+00> : vector<2x32xf32>
    %707 = tpu.matmul %706, %39, %cst_173 {dimension_numbers = #tpu.dot_dimension_numbers<[1], [0], [0], [1], [0, 0, 1, 1], [], []>} : vector<2x32xf32>, vector<32x32xf32>, vector<2x32xf32> -> vector<2x32xf32>
    %708 = arith.addf %707, %42 : vector<2x32xf32>
    %709 = arith.subf %623, %51 : vector<2x32xf32>
    %cst_174 = arith.constant 0.000000e+00 : f32
    %710 = vector.broadcast %cst_174 : f32 to vector<2x32xf32>
    %711 = arith.cmpf ogt, %709, %710 : vector<2x32xf32>
    %712 = arith.extui %711 : vector<2x32xi1> to vector<2x32xi32>
    %713 = arith.sitofp %712 : vector<2x32xi32> to vector<2x32xf32>
    %714 = arith.mulf %45, %619 : vector<2x32xf32>
    %715 = arith.addf %714, %708 : vector<2x32xf32>
    %716 = arith.mulf %48, %623 : vector<2x32xf32>
    %717 = arith.addf %716, %715 : vector<2x32xf32>
    %718 = arith.mulf %713, %51 : vector<2x32xf32>
    %719 = arith.subf %717, %718 : vector<2x32xf32>
    %720 = arith.subf %719, %51 : vector<2x32xf32>
    %cst_175 = arith.constant 0.000000e+00 : f32
    %721 = vector.broadcast %cst_175 : f32 to vector<2x32xf32>
    %722 = arith.cmpf ogt, %720, %721 : vector<2x32xf32>
    %723 = arith.extui %722 : vector<2x32xi1> to vector<2x32xi32>
    %724 = arith.sitofp %723 : vector<2x32xi32> to vector<2x32xf32>
    %cst_176 = arith.constant dense<0.000000e+00> : vector<2x32xf32>
    %725 = tpu.matmul %724, %52, %cst_176 {dimension_numbers = #tpu.dot_dimension_numbers<[1], [0], [0], [1], [0, 0, 1, 1], [], []>} : vector<2x32xf32>, vector<32x32xf32>, vector<2x32xf32> -> vector<2x32xf32>
    %726 = arith.addf %725, %55 : vector<2x32xf32>
    %727 = arith.subf %641, %64 : vector<2x32xf32>
    %cst_177 = arith.constant 0.000000e+00 : f32
    %728 = vector.broadcast %cst_177 : f32 to vector<2x32xf32>
    %729 = arith.cmpf ogt, %727, %728 : vector<2x32xf32>
    %730 = arith.extui %729 : vector<2x32xi1> to vector<2x32xi32>
    %731 = arith.sitofp %730 : vector<2x32xi32> to vector<2x32xf32>
    %732 = arith.mulf %58, %637 : vector<2x32xf32>
    %733 = arith.addf %732, %726 : vector<2x32xf32>
    %734 = arith.mulf %61, %641 : vector<2x32xf32>
    %735 = arith.addf %734, %733 : vector<2x32xf32>
    %736 = arith.mulf %731, %64 : vector<2x32xf32>
    %737 = arith.subf %735, %736 : vector<2x32xf32>
    %738 = arith.subf %737, %64 : vector<2x32xf32>
    %cst_178 = arith.constant 0.000000e+00 : f32
    %739 = vector.broadcast %cst_178 : f32 to vector<2x32xf32>
    %740 = arith.cmpf ogt, %738, %739 : vector<2x32xf32>
    %741 = arith.extui %740 : vector<2x32xi1> to vector<2x32xi32>
    %742 = arith.sitofp %741 : vector<2x32xi32> to vector<2x32xf32>
    %743 = vector.extract_strided_slice %742 {offsets = [0, 0], sizes = [2, 8], strides = [1, 1]} : vector<2x32xf32> to vector<2x8xf32>
    %c6_179 = arith.constant 6 : index
    %c0_180 = arith.constant 0 : index
    %c0_181 = arith.constant 0 : index
    %744 = vector.load %arg3[%c6_179, %c0_180, %c0_181] : memref<8x2x8xf32, #tpu.memory_space<vmem>>, vector<1x2x8xf32>
    %745 = vector.shape_cast %744 : vector<1x2x8xf32> to vector<2x8xf32>
    %746 = vector.shape_cast %743 : vector<2x8xf32> to vector<1x2x8xf32>
    tpu.vector_store %arg3[%c6_179, %c0_180, %c0_181], %746 {strides = array<i32>} : memref<8x2x8xf32, #tpu.memory_space<vmem>>, vector<1x2x8xf32>,
    %c7_182 = arith.constant 7 : index
    %c0_183 = arith.constant 0 : index
    %c0_184 = arith.constant 0 : index
    %747 = vector.load %arg0[%c7_182, %c0_183, %c0_184] : memref<8x2x32xf32, #tpu.memory_space<vmem>>, vector<1x2x32xf32>
    %748 = vector.shape_cast %747 : vector<1x2x32xf32> to vector<2x32xf32>
    %cst_185 = arith.constant dense<0.000000e+00> : vector<2x32xf32>
    %749 = tpu.matmul %748, %0, %cst_185 {dimension_numbers = #tpu.dot_dimension_numbers<[1], [0], [0], [1], [0, 0, 1, 1], [], []>} : vector<2x32xf32>, vector<32x32xf32>, vector<2x32xf32> -> vector<2x32xf32>
    %750 = arith.addf %749, %3 : vector<2x32xf32>
    %751 = arith.subf %665, %12 : vector<2x32xf32>
    %cst_186 = arith.constant 0.000000e+00 : f32
    %752 = vector.broadcast %cst_186 : f32 to vector<2x32xf32>
    %753 = arith.cmpf ogt, %751, %752 : vector<2x32xf32>
    %754 = arith.extui %753 : vector<2x32xi1> to vector<2x32xi32>
    %755 = arith.sitofp %754 : vector<2x32xi32> to vector<2x32xf32>
    %756 = arith.mulf %6, %661 : vector<2x32xf32>
    %757 = arith.addf %756, %750 : vector<2x32xf32>
    %758 = arith.mulf %9, %665 : vector<2x32xf32>
    %759 = arith.addf %758, %757 : vector<2x32xf32>
    %760 = arith.mulf %755, %12 : vector<2x32xf32>
    %761 = arith.subf %759, %760 : vector<2x32xf32>
    %762 = arith.subf %761, %12 : vector<2x32xf32>
    %cst_187 = arith.constant 0.000000e+00 : f32
    %763 = vector.broadcast %cst_187 : f32 to vector<2x32xf32>
    %764 = arith.cmpf ogt, %762, %763 : vector<2x32xf32>
    %765 = arith.extui %764 : vector<2x32xi1> to vector<2x32xi32>
    %766 = arith.sitofp %765 : vector<2x32xi32> to vector<2x32xf32>
    %cst_188 = arith.constant dense<0.000000e+00> : vector<2x32xf32>
    %767 = tpu.matmul %766, %13, %cst_188 {dimension_numbers = #tpu.dot_dimension_numbers<[1], [0], [0], [1], [0, 0, 1, 1], [], []>} : vector<2x32xf32>, vector<32x32xf32>, vector<2x32xf32> -> vector<2x32xf32>
    %768 = arith.addf %767, %16 : vector<2x32xf32>
    %769 = arith.subf %683, %25 : vector<2x32xf32>
    %cst_189 = arith.constant 0.000000e+00 : f32
    %770 = vector.broadcast %cst_189 : f32 to vector<2x32xf32>
    %771 = arith.cmpf ogt, %769, %770 : vector<2x32xf32>
    %772 = arith.extui %771 : vector<2x32xi1> to vector<2x32xi32>
    %773 = arith.sitofp %772 : vector<2x32xi32> to vector<2x32xf32>
    %774 = arith.mulf %19, %679 : vector<2x32xf32>
    %775 = arith.addf %774, %768 : vector<2x32xf32>
    %776 = arith.mulf %22, %683 : vector<2x32xf32>
    %777 = arith.addf %776, %775 : vector<2x32xf32>
    %778 = arith.mulf %773, %25 : vector<2x32xf32>
    %779 = arith.subf %777, %778 : vector<2x32xf32>
    %780 = arith.subf %779, %25 : vector<2x32xf32>
    %cst_190 = arith.constant 0.000000e+00 : f32
    %781 = vector.broadcast %cst_190 : f32 to vector<2x32xf32>
    %782 = arith.cmpf ogt, %780, %781 : vector<2x32xf32>
    %783 = arith.extui %782 : vector<2x32xi1> to vector<2x32xi32>
    %784 = arith.sitofp %783 : vector<2x32xi32> to vector<2x32xf32>
    %cst_191 = arith.constant dense<0.000000e+00> : vector<2x32xf32>
    %785 = tpu.matmul %784, %26, %cst_191 {dimension_numbers = #tpu.dot_dimension_numbers<[1], [0], [0], [1], [0, 0, 1, 1], [], []>} : vector<2x32xf32>, vector<32x32xf32>, vector<2x32xf32> -> vector<2x32xf32>
    %786 = arith.addf %785, %29 : vector<2x32xf32>
    %787 = arith.subf %701, %38 : vector<2x32xf32>
    %cst_192 = arith.constant 0.000000e+00 : f32
    %788 = vector.broadcast %cst_192 : f32 to vector<2x32xf32>
    %789 = arith.cmpf ogt, %787, %788 : vector<2x32xf32>
    %790 = arith.extui %789 : vector<2x32xi1> to vector<2x32xi32>
    %791 = arith.sitofp %790 : vector<2x32xi32> to vector<2x32xf32>
    %792 = arith.mulf %32, %697 : vector<2x32xf32>
    %793 = arith.addf %792, %786 : vector<2x32xf32>
    %794 = arith.mulf %35, %701 : vector<2x32xf32>
    %795 = arith.addf %794, %793 : vector<2x32xf32>
    %796 = arith.mulf %791, %38 : vector<2x32xf32>
    %797 = arith.subf %795, %796 : vector<2x32xf32>
    %798 = arith.subf %797, %38 : vector<2x32xf32>
    %cst_193 = arith.constant 0.000000e+00 : f32
    %799 = vector.broadcast %cst_193 : f32 to vector<2x32xf32>
    %800 = arith.cmpf ogt, %798, %799 : vector<2x32xf32>
    %801 = arith.extui %800 : vector<2x32xi1> to vector<2x32xi32>
    %802 = arith.sitofp %801 : vector<2x32xi32> to vector<2x32xf32>
    %cst_194 = arith.constant dense<0.000000e+00> : vector<2x32xf32>
    %803 = tpu.matmul %802, %39, %cst_194 {dimension_numbers = #tpu.dot_dimension_numbers<[1], [0], [0], [1], [0, 0, 1, 1], [], []>} : vector<2x32xf32>, vector<32x32xf32>, vector<2x32xf32> -> vector<2x32xf32>
    %804 = arith.addf %803, %42 : vector<2x32xf32>
    %805 = arith.subf %719, %51 : vector<2x32xf32>
    %cst_195 = arith.constant 0.000000e+00 : f32
    %806 = vector.broadcast %cst_195 : f32 to vector<2x32xf32>
    %807 = arith.cmpf ogt, %805, %806 : vector<2x32xf32>
    %808 = arith.extui %807 : vector<2x32xi1> to vector<2x32xi32>
    %809 = arith.sitofp %808 : vector<2x32xi32> to vector<2x32xf32>
    %810 = arith.mulf %45, %715 : vector<2x32xf32>
    %811 = arith.addf %810, %804 : vector<2x32xf32>
    %812 = arith.mulf %48, %719 : vector<2x32xf32>
    %813 = arith.addf %812, %811 : vector<2x32xf32>
    %814 = arith.mulf %809, %51 : vector<2x32xf32>
    %815 = arith.subf %813, %814 : vector<2x32xf32>
    %816 = arith.subf %815, %51 : vector<2x32xf32>
    %cst_196 = arith.constant 0.000000e+00 : f32
    %817 = vector.broadcast %cst_196 : f32 to vector<2x32xf32>
    %818 = arith.cmpf ogt, %816, %817 : vector<2x32xf32>
    %819 = arith.extui %818 : vector<2x32xi1> to vector<2x32xi32>
    %820 = arith.sitofp %819 : vector<2x32xi32> to vector<2x32xf32>
    %cst_197 = arith.constant dense<0.000000e+00> : vector<2x32xf32>
    %821 = tpu.matmul %820, %52, %cst_197 {dimension_numbers = #tpu.dot_dimension_numbers<[1], [0], [0], [1], [0, 0, 1, 1], [], []>} : vector<2x32xf32>, vector<32x32xf32>, vector<2x32xf32> -> vector<2x32xf32>
    %822 = arith.addf %821, %55 : vector<2x32xf32>
    %823 = arith.subf %737, %64 : vector<2x32xf32>
    %cst_198 = arith.constant 0.000000e+00 : f32
    %824 = vector.broadcast %cst_198 : f32 to vector<2x32xf32>
    %825 = arith.cmpf ogt, %823, %824 : vector<2x32xf32>
    %826 = arith.extui %825 : vector<2x32xi1> to vector<2x32xi32>
    %827 = arith.sitofp %826 : vector<2x32xi32> to vector<2x32xf32>
    %828 = arith.mulf %58, %733 : vector<2x32xf32>
    %829 = arith.addf %828, %822 : vector<2x32xf32>
    %830 = arith.mulf %61, %737 : vector<2x32xf32>
    %831 = arith.addf %830, %829 : vector<2x32xf32>
    %832 = arith.mulf %827, %64 : vector<2x32xf32>
    %833 = arith.subf %831, %832 : vector<2x32xf32>
    %834 = arith.subf %833, %64 : vector<2x32xf32>
    %cst_199 = arith.constant 0.000000e+00 : f32
    %835 = vector.broadcast %cst_199 : f32 to vector<2x32xf32>
    %836 = arith.cmpf ogt, %834, %835 : vector<2x32xf32>
    %837 = arith.extui %836 : vector<2x32xi1> to vector<2x32xi32>
    %838 = arith.sitofp %837 : vector<2x32xi32> to vector<2x32xf32>
    %839 = vector.extract_strided_slice %838 {offsets = [0, 0], sizes = [2, 8], strides = [1, 1]} : vector<2x32xf32> to vector<2x8xf32>
    %c7_200 = arith.constant 7 : index
    %c0_201 = arith.constant 0 : index
    %c0_202 = arith.constant 0 : index
    %840 = vector.load %arg3[%c7_200, %c0_201, %c0_202] : memref<8x2x8xf32, #tpu.memory_space<vmem>>, vector<1x2x8xf32>
    %841 = vector.shape_cast %840 : vector<1x2x8xf32> to vector<2x8xf32>
    %842 = vector.shape_cast %839 : vector<2x8xf32> to vector<1x2x8xf32>
    tpu.vector_store %arg3[%c7_200, %c0_201, %c0_202], %842 {strides = array<i32>} : memref<8x2x8xf32, #tpu.memory_space<vmem>>, vector<1x2x8xf32>,
    return
  }
}

</mosaic_0001>

<llo_original>
// kernel: rdl_snn_synaptic_forward.1
$region0: #{rdl_snn_synaptic_forward.1}
  #allocation0 [shape = 'u32[]', space=smem, size = 0x4, offset = 0x4, fixed_abs, tag = 'smem constant byte address 0x4 - core index']
  #allocation1 [shape = 'u32[72,128]{1,0:T(1,128)}', space=vmem, size = 0x9000, scoped, tag = 'internal scratch']
  %s0 = inlined_call_operand.vmem [shape: f32[8,2,32], index: 0, kind: input, shape index: {}]
  %s1 = inlined_call_operand.vmem [shape: f32[160,32], index: 1, kind: input, shape index: {}]
  %s2 = inlined_call_operand.vmem [shape: f32[20,32], index: 2, kind: input, shape index: {}]
  %s3 = inlined_call_operand.hbm [shape: f32[8,2,8], index: 3, kind: output, shape index: {}]
  %s4 = sld [smem:[#allocation0]]
  $region22: #{rdl_snn_synaptic_forward.1} parent=0
    _
  %s6 = ssub.s32 1, %s4
  %s7 = scalar_select 0, %s6, %s4
  $region1: #{rdl_snn_synaptic_forward.1} parent=0
    #allocation2 [shape = 'u8[8192]{0}', space=vmem, size = 0x2000, scoped, tag = 'output window, operand 0, single buffered']
    #allocation3 [shape = 's32[1]{0}', space=sflag, size = 0x4, scoped, tag = 'scoped memory for rdl_snn_synaptic_forward.1']
    %8 = vsyncpa [#allocation3], 0
    // Predicated region
    $region2: #{rdl_snn_synaptic_forward.1} parent=1 // pred_check
      _
    $region3: #{rdl_snn_synaptic_forward.1} parent=1 // pred_check_branch
      %10 = sbr.rel (0) target = $region5
    $region4: #{rdl_snn_synaptic_forward.1} parent=1 // pred_region
      _
    $region5: #{rdl_snn_synaptic_forward.1} parent=1 // pred_fallthru
      _
    // Predicated region
    $region6: #{rdl_snn_synaptic_forward.1} parent=1 // pred_check
      _
    $region7: #{rdl_snn_synaptic_forward.1} parent=1 // pred_check_branch
      %12 = sbr.rel (0) target = $region9
    $region8: #{rdl_snn_synaptic_forward.1} parent=1 // pred_region
      _
    $region9: #{rdl_snn_synaptic_forward.1} parent=1 // pred_fallthru
      _
    // Predicated region
    $region10: #{rdl_snn_synaptic_forward.1} parent=1 // pred_check
      _
    $region11: #{rdl_snn_synaptic_forward.1} parent=1 // pred_check_branch
      %14 = sbr.rel (0) target = $region13
    $region12: #{rdl_snn_synaptic_forward.1} parent=1 // pred_region
      _
    $region13: #{rdl_snn_synaptic_forward.1} parent=1 // pred_fallthru
      _
    %v15 = vld [vmem:[%s1] sm:$0xff]
    %v16 = vld [vmem:[%s1 + $0x8] sm:$0xff]
    %v17 = vld [vmem:[%s1 + $0x10] sm:$0xff]
    %v18 = vld [vmem:[%s1 + $0x18] sm:$0xff]
    %v19 = vld [vmem:[%s2] sm:$0x1]
    %v20 = vperm.slane %v19, 0
    %v21 = vld [vmem:[%s2 + $0x1] sm:$0x1]
    %v22 = vperm.slane %v21, 0
    %v23 = vld [vmem:[%s2 + $0x2] sm:$0x1]
    %v24 = vperm.slane %v23, 0
    %v25 = vld [vmem:[%s2 + $0x3] sm:$0x1]
    %v26 = vperm.slane %v25, 0
    %v27 = vld [vmem:[%s1 + $0x20] sm:$0xff]
    %v28 = vld [vmem:[%s1 + $0x28] sm:$0xff]
    %v29 = vld [vmem:[%s1 + $0x30] sm:$0xff]
    %v30 = vld [vmem:[%s1 + $0x38] sm:$0xff]
    %v31 = vld [vmem:[%s2 + $0x4] sm:$0x1]
    %v32 = vperm.slane %v31, 0
    %v33 = vld [vmem:[%s2 + $0x5] sm:$0x1]
    %v34 = vperm.slane %v33, 0
    %v35 = vld [vmem:[%s2 + $0x6] sm:$0x1]
    %v36 = vperm.slane %v35, 0
    %v37 = vld [vmem:[%s2 + $0x7] sm:$0x1]
    %v38 = vperm.slane %v37, 0
    %v39 = vld [vmem:[%s1 + $0x40] sm:$0xff]
    %v40 = vld [vmem:[%s1 + $0x48] sm:$0xff]
    %v41 = vld [vmem:[%s1 + $0x50] sm:$0xff]
    %v42 = vld [vmem:[%s1 + $0x58] sm:$0xff]
    %v43 = vld [vmem:[%s2 + $0x8] sm:$0x1]
    %v44 = vperm.slane %v43, 0
    %v45 = vld [vmem:[%s2 + $0x9] sm:$0x1]
    %v46 = vperm.slane %v45, 0
    %v47 = vld [vmem:[%s2 + $0xa] sm:$0x1]
    %v48 = vperm.slane %v47, 0
    %v49 = vld [vmem:[%s2 + $0xb] sm:$0x1]
    %v50 = vperm.slane %v49, 0
    %v51 = vld [vmem:[%s1 + $0x60] sm:$0xff]
    %v52 = vld [vmem:[%s1 + $0x68] sm:$0xff]
    %v53 = vld [vmem:[%s1 + $0x70] sm:$0xff]
    %v54 = vld [vmem:[%s1 + $0x78] sm:$0xff]
    %v55 = vld [vmem:[%s2 + $0xc] sm:$0x1]
    %v56 = vperm.slane %v55, 0
    %v57 = vld [vmem:[%s2 + $0xd] sm:$0x1]
    %v58 = vperm.slane %v57, 0
    %v59 = vld [vmem:[%s2 + $0xe] sm:$0x1]
    %v60 = vperm.slane %v59, 0
    %v61 = vld [vmem:[%s2 + $0xf] sm:$0x1]
    %v62 = vperm.slane %v61, 0
    %v63 = vld [vmem:[%s1 + $0x80] sm:$0xff]
    %v64 = vld [vmem:[%s1 + $0x88] sm:$0xff]
    %v65 = vld [vmem:[%s1 + $0x90] sm:$0xff]
    %v66 = vld [vmem:[%s1 + $0x98] sm:$0xff]
    %v67 = vld [vmem:[%s2 + $0x10] sm:$0x1]
    %v68 = vperm.slane %v67, 0
    %v69 = vld [vmem:[%s2 + $0x11] sm:$0x1]
    %v70 = vperm.slane %v69, 0
    %v71 = vld [vmem:[%s2 + $0x12] sm:$0x1]
    %v72 = vperm.slane %v71, 0
    %v73 = vld [vmem:[%s2 + $0x13] sm:$0x1]
    %v74 = vperm.slane %v73, 0
    %v75 = vld [vmem:[%s0] sm:$0x3]
    %vm76 = vcmask 261120
    %v78 = vsel %vm76, %v75, 0
    %80 = vmatpush.msra.mxu0 0.0
    %81 = vmatpush.msra.mxu0 0.0
    %82 = vmatpush.msra.mxu0 0.0
    %83 = vmatpush.msra.mxu0 0.0
    %84 = vmatpush.msra.mxu0 0.0
    %85 = vmatpush.msra.mxu0 0.0
    %86 = vmatpush.msra.mxu0 0.0
    %87 = vmatpush.msra.mxu0 0.0
    %88 = vmatpush.msra.mxu0 0.0
    %89 = vmatpush.msra.mxu0 0.0
    %90 = vmatpush.msra.mxu0 0.0
    %91 = vmatpush.msra.mxu0 0.0
    %92 = vmatpush.msra.mxu0 %v18
    %93 = vmatpush.msra.mxu0 %v17
    %94 = vmatpush.msra.mxu0 %v16
    %95 = vmatpush.msra.mxu0 %v15
    %96 = vmatmul.f32.gmra.mxu0 %v78
    %v97 = vpop.f32.mrf.mxu0
    %v98 = vadd.f32 %v20, %v97
    %99 = vdwg.mxu0
    %v100 = vsub.f32 0.0, %v26
    %vm101 = vcmp.gt.f32.partialorder %v100, 0.0
    %v102 = vsel %vm101, 1, 0
    %v103 = vcvt.s32.f32 %v102
    %v104 = vmul.f32 %v22, 0.0
    %v105 = vadd.f32 %v104, %v98
    %v106 = vmul.f32 %v24, 0.0
    %v107 = vadd.f32 %v106, %v105
    %v108 = vmul.f32 %v103, %v26
    %v109 = vsub.f32 %v107, %v108
    %v110 = vsub.f32 %v109, %v26
    %vm111 = vcmp.gt.f32.partialorder %v110, 0.0
    %v112 = vsel %vm111, 1, 0
    %v113 = vcvt.s32.f32 %v112
    %v115 = vsel %vm76, %v113, 0
    %117 = vmatpush.msra.mxu0 0.0
    %118 = vmatpush.msra.mxu0 0.0
    %119 = vmatpush.msra.mxu0 0.0
    %120 = vmatpush.msra.mxu0 0.0
    %121 = vmatpush.msra.mxu0 0.0
    %122 = vmatpush.msra.mxu0 0.0
    %123 = vmatpush.msra.mxu0 0.0
    %124 = vmatpush.msra.mxu0 0.0
    %125 = vmatpush.msra.mxu0 0.0
    %126 = vmatpush.msra.mxu0 0.0
    %127 = vmatpush.msra.mxu0 0.0
    %128 = vmatpush.msra.mxu0 0.0
    %129 = vmatpush.msra.mxu0 %v30
    %130 = vmatpush.msra.mxu0 %v29
    %131 = vmatpush.msra.mxu0 %v28
    %132 = vmatpush.msra.mxu0 %v27
    %133 = vmatmul.f32.gmra.mxu0 %v115
    %v134 = vpop.f32.mrf.mxu0
    %v135 = vadd.f32 %v32, %v134
    %136 = vdwg.mxu0
    %v137 = vsub.f32 0.0, %v38
    %vm138 = vcmp.gt.f32.partialorder %v137, 0.0
    %v139 = vsel %vm138, 1, 0
    %v140 = vcvt.s32.f32 %v139
    %v141 = vmul.f32 %v34, 0.0
    %v142 = vadd.f32 %v141, %v135
    %v143 = vmul.f32 %v36, 0.0
    %v144 = vadd.f32 %v143, %v142
    %v145 = vmul.f32 %v140, %v38
    %v146 = vsub.f32 %v144, %v145
    %v147 = vsub.f32 %v146, %v38
    %vm148 = vcmp.gt.f32.partialorder %v147, 0.0
    %v149 = vsel %vm148, 1, 0
    %v150 = vcvt.s32.f32 %v149
    %v152 = vsel %vm76, %v150, 0
    %154 = vmatpush.msra.mxu0 0.0
    %155 = vmatpush.msra.mxu0 0.0
    %156 = vmatpush.msra.mxu0 0.0
    %157 = vmatpush.msra.mxu0 0.0
    %158 = vmatpush.msra.mxu0 0.0
    %159 = vmatpush.msra.mxu0 0.0
    %160 = vmatpush.msra.mxu0 0.0
    %161 = vmatpush.msra.mxu0 0.0
    %162 = vmatpush.msra.mxu0 0.0
    %163 = vmatpush.msra.mxu0 0.0
    %164 = vmatpush.msra.mxu0 0.0
    %165 = vmatpush.msra.mxu0 0.0
    %166 = vmatpush.msra.mxu0 %v42
    %167 = vmatpush.msra.mxu0 %v41
    %168 = vmatpush.msra.mxu0 %v40
    %169 = vmatpush.msra.mxu0 %v39
    %170 = vmatmul.f32.gmra.mxu0 %v152
    %v171 = vpop.f32.mrf.mxu0
    %v172 = vadd.f32 %v44, %v171
    %173 = vdwg.mxu0
    %v174 = vsub.f32 0.0, %v50
    %vm175 = vcmp.gt.f32.partialorder %v174, 0.0
    %v176 = vsel %vm175, 1, 0
    %v177 = vcvt.s32.f32 %v176
    %v178 = vmul.f32 %v46, 0.0
    %v179 = vadd.f32 %v178, %v172
    %v180 = vmul.f32 %v48, 0.0
    %v181 = vadd.f32 %v180, %v179
    %v182 = vmul.f32 %v177, %v50
    %v183 = vsub.f32 %v181, %v182
    %v184 = vsub.f32 %v183, %v50
    %vm185 = vcmp.gt.f32.partialorder %v184, 0.0
    %v186 = vsel %vm185, 1, 0
    %v187 = vcvt.s32.f32 %v186
    %v189 = vsel %vm76, %v187, 0
    %191 = vmatpush.msra.mxu0 0.0
    %192 = vmatpush.msra.mxu0 0.0
    %193 = vmatpush.msra.mxu0 0.0
    %194 = vmatpush.msra.mxu0 0.0
    %195 = vmatpush.msra.mxu0 0.0
    %196 = vmatpush.msra.mxu0 0.0
    %197 = vmatpush.msra.mxu0 0.0
    %198 = vmatpush.msra.mxu0 0.0
    %199 = vmatpush.msra.mxu0 0.0
    %200 = vmatpush.msra.mxu0 0.0
    %201 = vmatpush.msra.mxu0 0.0
    %202 = vmatpush.msra.mxu0 0.0
    %203 = vmatpush.msra.mxu0 %v54
    %204 = vmatpush.msra.mxu0 %v53
    %205 = vmatpush.msra.mxu0 %v52
    %206 = vmatpush.msra.mxu0 %v51
    %207 = vmatmul.f32.gmra.mxu0 %v189
    %v208 = vpop.f32.mrf.mxu0
    %v209 = vadd.f32 %v56, %v208
    %210 = vdwg.mxu0
    %v211 = vsub.f32 0.0, %v62
    %vm212 = vcmp.gt.f32.partialorder %v211, 0.0
    %v213 = vsel %vm212, 1, 0
    %v214 = vcvt.s32.f32 %v213
    %v215 = vmul.f32 %v58, 0.0
    %v216 = vadd.f32 %v215, %v209
    %v217 = vmul.f32 %v60, 0.0
    %v218 = vadd.f32 %v217, %v216
    %v219 = vmul.f32 %v214, %v62
    %v220 = vsub.f32 %v218, %v219
    %v221 = vsub.f32 %v220, %v62
    %vm222 = vcmp.gt.f32.partialorder %v221, 0.0
    %v223 = vsel %vm222, 1, 0
    %v224 = vcvt.s32.f32 %v223
    %v226 = vsel %vm76, %v224, 0
    %228 = vmatpush.msra.mxu0 0.0
    %229 = vmatpush.msra.mxu0 0.0
    %230 = vmatpush.msra.mxu0 0.0
    %231 = vmatpush.msra.mxu0 0.0
    %232 = vmatpush.msra.mxu0 0.0
    %233 = vmatpush.msra.mxu0 0.0
    %234 = vmatpush.msra.mxu0 0.0
    %235 = vmatpush.msra.mxu0 0.0
    %236 = vmatpush.msra.mxu0 0.0
    %237 = vmatpush.msra.mxu0 0.0
    %238 = vmatpush.msra.mxu0 0.0
    %239 = vmatpush.msra.mxu0 0.0
    %240 = vmatpush.msra.mxu0 %v66
    %241 = vmatpush.msra.mxu0 %v65
    %242 = vmatpush.msra.mxu0 %v64
    %243 = vmatpush.msra.mxu0 %v63
    %244 = vmatmul.f32.gmra.mxu0 %v226
    %v245 = vpop.f32.mrf.mxu0
    %v246 = vadd.f32 %v68, %v245
    %247 = vdwg.mxu0
    %v248 = vsub.f32 0.0, %v74
    %vm249 = vcmp.gt.f32.partialorder %v248, 0.0
    %v250 = vsel %vm249, 1, 0
    %v251 = vcvt.s32.f32 %v250
    %v252 = vmul.f32 %v70, 0.0
    %v253 = vadd.f32 %v252, %v246
    %v254 = vmul.f32 %v72, 0.0
    %v255 = vadd.f32 %v254, %v253
    %v256 = vmul.f32 %v251, %v74
    %v257 = vsub.f32 %v255, %v256
    %v258 = vsub.f32 %v257, %v74
    %vm259 = vcmp.gt.f32.partialorder %v258, 0.0
    %v260 = vsel %vm259, 1, 0
    %v261 = vcvt.s32.f32 %v260
    %vm262 = vcmask 58368
    %263 = vst.msk [vmem:[#allocation2] sm:$0x3] %vm262, %v261
    %s264 = scalar_lea.vmem %s0, 2
    %v265 = vld [vmem:[%s264] sm:$0x3]
    %v267 = vsel %vm76, %v265, 0
    %269 = vmatpush.msra.mxu0 0.0
    %270 = vmatpush.msra.mxu0 0.0
    %271 = vmatpush.msra.mxu0 0.0
    %272 = vmatpush.msra.mxu0 0.0
    %273 = vmatpush.msra.mxu0 0.0
    %274 = vmatpush.msra.mxu0 0.0
    %275 = vmatpush.msra.mxu0 0.0
    %276 = vmatpush.msra.mxu0 0.0
    %277 = vmatpush.msra.mxu0 0.0
    %278 = vmatpush.msra.mxu0 0.0
    %279 = vmatpush.msra.mxu0 0.0
    %280 = vmatpush.msra.mxu0 0.0
    %281 = vmatpush.msra.mxu0 %v18
    %282 = vmatpush.msra.mxu0 %v17
    %283 = vmatpush.msra.mxu0 %v16
    %284 = vmatpush.msra.mxu0 %v15
    %285 = vmatmul.f32.gmra.mxu0 %v267
    %v286 = vpop.f32.mrf.mxu0
    %v287 = vadd.f32 %v20, %v286
    %288 = vdwg.mxu0
    %v289 = vmul.f32 %v22, %v105
    %v290 = vadd.f32 %v289, %v287
    %v291 = vmul.f32 %v24, %v109
    %v292 = vadd.f32 %v291, %v290
    %v293 = vmul.f32 %v113, %v26
    %v294 = vsub.f32 %v292, %v293
    %v295 = vsub.f32 %v294, %v26
    %vm296 = vcmp.gt.f32.partialorder %v295, 0.0
    %v297 = vsel %vm296, 1, 0
    %v298 = vcvt.s32.f32 %v297
    %v300 = vsel %vm76, %v298, 0
    %302 = vmatpush.msra.mxu0 0.0
    %303 = vmatpush.msra.mxu0 0.0
    %304 = vmatpush.msra.mxu0 0.0
    %305 = vmatpush.msra.mxu0 0.0
    %306 = vmatpush.msra.mxu0 0.0
    %307 = vmatpush.msra.mxu0 0.0
    %308 = vmatpush.msra.mxu0 0.0
    %309 = vmatpush.msra.mxu0 0.0
    %310 = vmatpush.msra.mxu0 0.0
    %311 = vmatpush.msra.mxu0 0.0
    %312 = vmatpush.msra.mxu0 0.0
    %313 = vmatpush.msra.mxu0 0.0
    %314 = vmatpush.msra.mxu0 %v30
    %315 = vmatpush.msra.mxu0 %v29
    %316 = vmatpush.msra.mxu0 %v28
    %317 = vmatpush.msra.mxu0 %v27
    %318 = vmatmul.f32.gmra.mxu0 %v300
    %v319 = vpop.f32.mrf.mxu0
    %v320 = vadd.f32 %v32, %v319
    %321 = vdwg.mxu0
    %v322 = vmul.f32 %v34, %v142
    %v323 = vadd.f32 %v322, %v320
    %v324 = vmul.f32 %v36, %v146
    %v325 = vadd.f32 %v324, %v323
    %v326 = vmul.f32 %v150, %v38
    %v327 = vsub.f32 %v325, %v326
    %v328 = vsub.f32 %v327, %v38
    %vm329 = vcmp.gt.f32.partialorder %v328, 0.0
    %v330 = vsel %vm329, 1, 0
    %v331 = vcvt.s32.f32 %v330
    %v333 = vsel %vm76, %v331, 0
    %335 = vmatpush.msra.mxu0 0.0
    %336 = vmatpush.msra.mxu0 0.0
    %337 = vmatpush.msra.mxu0 0.0
    %338 = vmatpush.msra.mxu0 0.0
    %339 = vmatpush.msra.mxu0 0.0
    %340 = vmatpush.msra.mxu0 0.0
    %341 = vmatpush.msra.mxu0 0.0
    %342 = vmatpush.msra.mxu0 0.0
    %343 = vmatpush.msra.mxu0 0.0
    %344 = vmatpush.msra.mxu0 0.0
    %345 = vmatpush.msra.mxu0 0.0
    %346 = vmatpush.msra.mxu0 0.0
    %347 = vmatpush.msra.mxu0 %v42
    %348 = vmatpush.msra.mxu0 %v41
    %349 = vmatpush.msra.mxu0 %v40
    %350 = vmatpush.msra.mxu0 %v39
    %351 = vmatmul.f32.gmra.mxu0 %v333
    %v352 = vpop.f32.mrf.mxu0
    %v353 = vadd.f32 %v44, %v352
    %354 = vdwg.mxu0
    %v355 = vmul.f32 %v46, %v179
    %v356 = vadd.f32 %v355, %v353
    %v357 = vmul.f32 %v48, %v183
    %v358 = vadd.f32 %v357, %v356
    %v359 = vmul.f32 %v187, %v50
    %v360 = vsub.f32 %v358, %v359
    %v361 = vsub.f32 %v360, %v50
    %vm362 = vcmp.gt.f32.partialorder %v361, 0.0
    %v363 = vsel %vm362, 1, 0
    %v364 = vcvt.s32.f32 %v363
    %v366 = vsel %vm76, %v364, 0
    %368 = vmatpush.msra.mxu0 0.0
    %369 = vmatpush.msra.mxu0 0.0
    %370 = vmatpush.msra.mxu0 0.0
    %371 = vmatpush.msra.mxu0 0.0
    %372 = vmatpush.msra.mxu0 0.0
    %373 = vmatpush.msra.mxu0 0.0
    %374 = vmatpush.msra.mxu0 0.0
    %375 = vmatpush.msra.mxu0 0.0
    %376 = vmatpush.msra.mxu0 0.0
    %377 = vmatpush.msra.mxu0 0.0
    %378 = vmatpush.msra.mxu0 0.0
    %379 = vmatpush.msra.mxu0 0.0
    %380 = vmatpush.msra.mxu0 %v54
    %381 = vmatpush.msra.mxu0 %v53
    %382 = vmatpush.msra.mxu0 %v52
    %383 = vmatpush.msra.mxu0 %v51
    %384 = vmatmul.f32.gmra.mxu0 %v366
    %v385 = vpop.f32.mrf.mxu0
    %v386 = vadd.f32 %v56, %v385
    %387 = vdwg.mxu0
    %v388 = vmul.f32 %v58, %v216
    %v389 = vadd.f32 %v388, %v386
    %v390 = vmul.f32 %v60, %v220
    %v391 = vadd.f32 %v390, %v389
    %v392 = vmul.f32 %v224, %v62
    %v393 = vsub.f32 %v391, %v392
    %v394 = vsub.f32 %v393, %v62
    %vm395 = vcmp.gt.f32.partialorder %v394, 0.0
    %v396 = vsel %vm395, 1, 0
    %v397 = vcvt.s32.f32 %v396
    %v399 = vsel %vm76, %v397, 0
    %401 = vmatpush.msra.mxu0 0.0
    %402 = vmatpush.msra.mxu0 0.0
    %403 = vmatpush.msra.mxu0 0.0
    %404 = vmatpush.msra.mxu0 0.0
    %405 = vmatpush.msra.mxu0 0.0
    %406 = vmatpush.msra.mxu0 0.0
    %407 = vmatpush.msra.mxu0 0.0
    %408 = vmatpush.msra.mxu0 0.0
    %409 = vmatpush.msra.mxu0 0.0
    %410 = vmatpush.msra.mxu0 0.0
    %411 = vmatpush.msra.mxu0 0.0
    %412 = vmatpush.msra.mxu0 0.0
    %413 = vmatpush.msra.mxu0 %v66
    %414 = vmatpush.msra.mxu0 %v65
    %415 = vmatpush.msra.mxu0 %v64
    %416 = vmatpush.msra.mxu0 %v63
    %417 = vmatmul.f32.gmra.mxu0 %v399
    %v418 = vpop.f32.mrf.mxu0
    %v419 = vadd.f32 %v68, %v418
    %420 = vdwg.mxu0
    %v421 = vmul.f32 %v70, %v253
    %v422 = vadd.f32 %v421, %v419
    %v423 = vmul.f32 %v72, %v257
    %v424 = vadd.f32 %v423, %v422
    %v425 = vmul.f32 %v261, %v74
    %v426 = vsub.f32 %v424, %v425
    %v427 = vsub.f32 %v426, %v74
    %vm428 = vcmp.gt.f32.partialorder %v427, 0.0
    %v429 = vsel %vm428, 1, 0
    %v430 = vcvt.s32.f32 %v429
    %s431 = scalar_lea.vmem [#allocation2], 2
    %432 = vst.msk [vmem:[%s431] sm:$0x3] %vm262, %v430
    %s433 = scalar_lea.vmem %s0, 4
    %v434 = vld [vmem:[%s433] sm:$0x3]
    %v436 = vsel %vm76, %v434, 0
    %438 = vmatpush.msra.mxu0 0.0
    %439 = vmatpush.msra.mxu0 0.0
    %440 = vmatpush.msra.mxu0 0.0
    %441 = vmatpush.msra.mxu0 0.0
    %442 = vmatpush.msra.mxu0 0.0
    %443 = vmatpush.msra.mxu0 0.0
    %444 = vmatpush.msra.mxu0 0.0
    %445 = vmatpush.msra.mxu0 0.0
    %446 = vmatpush.msra.mxu0 0.0
    %447 = vmatpush.msra.mxu0 0.0
    %448 = vmatpush.msra.mxu0 0.0
    %449 = vmatpush.msra.mxu0 0.0
    %450 = vmatpush.msra.mxu0 %v18
    %451 = vmatpush.msra.mxu0 %v17
    %452 = vmatpush.msra.mxu0 %v16
    %453 = vmatpush.msra.mxu0 %v15
    %454 = vmatmul.f32.gmra.mxu0 %v436
    %v455 = vpop.f32.mrf.mxu0
    %v456 = vadd.f32 %v20, %v455
    %457 = vdwg.mxu0
    %v458 = vmul.f32 %v22, %v290
    %v459 = vadd.f32 %v458, %v456
    %v460 = vmul.f32 %v24, %v294
    %v461 = vadd.f32 %v460, %v459
    %v462 = vmul.f32 %v298, %v26
    %v463 = vsub.f32 %v461, %v462
    %v464 = vsub.f32 %v463, %v26
    %vm465 = vcmp.gt.f32.partialorder %v464, 0.0
    %v466 = vsel %vm465, 1, 0
    %v467 = vcvt.s32.f32 %v466
    %v469 = vsel %vm76, %v467, 0
    %471 = vmatpush.msra.mxu0 0.0
    %472 = vmatpush.msra.mxu0 0.0
    %473 = vmatpush.msra.mxu0 0.0
    %474 = vmatpush.msra.mxu0 0.0
    %475 = vmatpush.msra.mxu0 0.0
    %476 = vmatpush.msra.mxu0 0.0
    %477 = vmatpush.msra.mxu0 0.0
    %478 = vmatpush.msra.mxu0 0.0
    %479 = vmatpush.msra.mxu0 0.0
    %480 = vmatpush.msra.mxu0 0.0
    %481 = vmatpush.msra.mxu0 0.0
    %482 = vmatpush.msra.mxu0 0.0
    %483 = vmatpush.msra.mxu0 %v30
    %484 = vmatpush.msra.mxu0 %v29
    %485 = vmatpush.msra.mxu0 %v28
    %486 = vmatpush.msra.mxu0 %v27
    %487 = vmatmul.f32.gmra.mxu0 %v469
    %v488 = vpop.f32.mrf.mxu0
    %v489 = vadd.f32 %v32, %v488
    %490 = vdwg.mxu0
    %v491 = vmul.f32 %v34, %v323
    %v492 = vadd.f32 %v491, %v489
    %v493 = vmul.f32 %v36, %v327
    %v494 = vadd.f32 %v493, %v492
    %v495 = vmul.f32 %v331, %v38
    %v496 = vsub.f32 %v494, %v495
    %v497 = vsub.f32 %v496, %v38
    %vm498 = vcmp.gt.f32.partialorder %v497, 0.0
    %v499 = vsel %vm498, 1, 0
    %v500 = vcvt.s32.f32 %v499
    %v502 = vsel %vm76, %v500, 0
    %504 = vmatpush.msra.mxu0 0.0
    %505 = vmatpush.msra.mxu0 0.0
    %506 = vmatpush.msra.mxu0 0.0
    %507 = vmatpush.msra.mxu0 0.0
    %508 = vmatpush.msra.mxu0 0.0
    %509 = vmatpush.msra.mxu0 0.0
    %510 = vmatpush.msra.mxu0 0.0
    %511 = vmatpush.msra.mxu0 0.0
    %512 = vmatpush.msra.mxu0 0.0
    %513 = vmatpush.msra.mxu0 0.0
    %514 = vmatpush.msra.mxu0 0.0
    %515 = vmatpush.msra.mxu0 0.0
    %516 = vmatpush.msra.mxu0 %v42
    %517 = vmatpush.msra.mxu0 %v41
    %518 = vmatpush.msra.mxu0 %v40
    %519 = vmatpush.msra.mxu0 %v39
    %520 = vmatmul.f32.gmra.mxu0 %v502
    %v521 = vpop.f32.mrf.mxu0
    %v522 = vadd.f32 %v44, %v521
    %523 = vdwg.mxu0
    %v524 = vmul.f32 %v46, %v356
    %v525 = vadd.f32 %v524, %v522
    %v526 = vmul.f32 %v48, %v360
    %v527 = vadd.f32 %v526, %v525
    %v528 = vmul.f32 %v364, %v50
    %v529 = vsub.f32 %v527, %v528
    %v530 = vsub.f32 %v529, %v50
    %vm531 = vcmp.gt.f32.partialorder %v530, 0.0
    %v532 = vsel %vm531, 1, 0
    %v533 = vcvt.s32.f32 %v532
    %v535 = vsel %vm76, %v533, 0
    %537 = vmatpush.msra.mxu0 0.0
    %538 = vmatpush.msra.mxu0 0.0
    %539 = vmatpush.msra.mxu0 0.0
    %540 = vmatpush.msra.mxu0 0.0
    %541 = vmatpush.msra.mxu0 0.0
    %542 = vmatpush.msra.mxu0 0.0
    %543 = vmatpush.msra.mxu0 0.0
    %544 = vmatpush.msra.mxu0 0.0
    %545 = vmatpush.msra.mxu0 0.0
    %546 = vmatpush.msra.mxu0 0.0
    %547 = vmatpush.msra.mxu0 0.0
    %548 = vmatpush.msra.mxu0 0.0
    %549 = vmatpush.msra.mxu0 %v54
    %550 = vmatpush.msra.mxu0 %v53
    %551 = vmatpush.msra.mxu0 %v52
    %552 = vmatpush.msra.mxu0 %v51
    %553 = vmatmul.f32.gmra.mxu0 %v535
    %v554 = vpop.f32.mrf.mxu0
    %v555 = vadd.f32 %v56, %v554
    %556 = vdwg.mxu0
    %v557 = vmul.f32 %v58, %v389
    %v558 = vadd.f32 %v557, %v555
    %v559 = vmul.f32 %v60, %v393
    %v560 = vadd.f32 %v559, %v558
    %v561 = vmul.f32 %v397, %v62
    %v562 = vsub.f32 %v560, %v561
    %v563 = vsub.f32 %v562, %v62
    %vm564 = vcmp.gt.f32.partialorder %v563, 0.0
    %v565 = vsel %vm564, 1, 0
    %v566 = vcvt.s32.f32 %v565
    %v568 = vsel %vm76, %v566, 0
    %570 = vmatpush.msra.mxu0 0.0
    %571 = vmatpush.msra.mxu0 0.0
    %572 = vmatpush.msra.mxu0 0.0
    %573 = vmatpush.msra.mxu0 0.0
    %574 = vmatpush.msra.mxu0 0.0
    %575 = vmatpush.msra.mxu0 0.0
    %576 = vmatpush.msra.mxu0 0.0
    %577 = vmatpush.msra.mxu0 0.0
    %578 = vmatpush.msra.mxu0 0.0
    %579 = vmatpush.msra.mxu0 0.0
    %580 = vmatpush.msra.mxu0 0.0
    %581 = vmatpush.msra.mxu0 0.0
    %582 = vmatpush.msra.mxu0 %v66
    %583 = vmatpush.msra.mxu0 %v65
    %584 = vmatpush.msra.mxu0 %v64
    %585 = vmatpush.msra.mxu0 %v63
    %586 = vmatmul.f32.gmra.mxu0 %v568
    %v587 = vpop.f32.mrf.mxu0
    %v588 = vadd.f32 %v68, %v587
    %589 = vdwg.mxu0
    %v590 = vmul.f32 %v70, %v422
    %v591 = vadd.f32 %v590, %v588
    %v592 = vmul.f32 %v72, %v426
    %v593 = vadd.f32 %v592, %v591
    %v594 = vmul.f32 %v430, %v74
    %v595 = vsub.f32 %v593, %v594
    %v596 = vsub.f32 %v595, %v74
    %vm597 = vcmp.gt.f32.partialorder %v596, 0.0
    %v598 = vsel %vm597, 1, 0
    %v599 = vcvt.s32.f32 %v598
    %s600 = scalar_lea.vmem [#allocation2], 4
    %601 = vst.msk [vmem:[%s600] sm:$0x3] %vm262, %v599
    %s602 = scalar_lea.vmem %s0, 6
    %v603 = vld [vmem:[%s602] sm:$0x3]
    %v605 = vsel %vm76, %v603, 0
    %607 = vmatpush.msra.mxu0 0.0
    %608 = vmatpush.msra.mxu0 0.0
    %609 = vmatpush.msra.mxu0 0.0
    %610 = vmatpush.msra.mxu0 0.0
    %611 = vmatpush.msra.mxu0 0.0
    %612 = vmatpush.msra.mxu0 0.0
    %613 = vmatpush.msra.mxu0 0.0
    %614 = vmatpush.msra.mxu0 0.0
    %615 = vmatpush.msra.mxu0 0.0
    %616 = vmatpush.msra.mxu0 0.0
    %617 = vmatpush.msra.mxu0 0.0
    %618 = vmatpush.msra.mxu0 0.0
    %619 = vmatpush.msra.mxu0 %v18
    %620 = vmatpush.msra.mxu0 %v17
    %621 = vmatpush.msra.mxu0 %v16
    %622 = vmatpush.msra.mxu0 %v15
    %623 = vmatmul.f32.gmra.mxu0 %v605
    %v624 = vpop.f32.mrf.mxu0
    %v625 = vadd.f32 %v20, %v624
    %626 = vdwg.mxu0
    %v627 = vmul.f32 %v22, %v459
    %v628 = vadd.f32 %v627, %v625
    %v629 = vmul.f32 %v24, %v463
    %v630 = vadd.f32 %v629, %v628
    %v631 = vmul.f32 %v467, %v26
    %v632 = vsub.f32 %v630, %v631
    %v633 = vsub.f32 %v632, %v26
    %vm634 = vcmp.gt.f32.partialorder %v633, 0.0
    %v635 = vsel %vm634, 1, 0
    %v636 = vcvt.s32.f32 %v635
    %v638 = vsel %vm76, %v636, 0
    %640 = vmatpush.msra.mxu0 0.0
    %641 = vmatpush.msra.mxu0 0.0
    %642 = vmatpush.msra.mxu0 0.0
    %643 = vmatpush.msra.mxu0 0.0
    %644 = vmatpush.msra.mxu0 0.0
    %645 = vmatpush.msra.mxu0 0.0
    %646 = vmatpush.msra.mxu0 0.0
    %647 = vmatpush.msra.mxu0 0.0
    %648 = vmatpush.msra.mxu0 0.0
    %649 = vmatpush.msra.mxu0 0.0
    %650 = vmatpush.msra.mxu0 0.0
    %651 = vmatpush.msra.mxu0 0.0
    %652 = vmatpush.msra.mxu0 %v30
    %653 = vmatpush.msra.mxu0 %v29
    %654 = vmatpush.msra.mxu0 %v28
    %655 = vmatpush.msra.mxu0 %v27
    %656 = vmatmul.f32.gmra.mxu0 %v638
    %v657 = vpop.f32.mrf.mxu0
    %v658 = vadd.f32 %v32, %v657
    %659 = vdwg.mxu0
    %v660 = vmul.f32 %v34, %v492
    %v661 = vadd.f32 %v660, %v658
    %v662 = vmul.f32 %v36, %v496
    %v663 = vadd.f32 %v662, %v661
    %v664 = vmul.f32 %v500, %v38
    %v665 = vsub.f32 %v663, %v664
    %v666 = vsub.f32 %v665, %v38
    %vm667 = vcmp.gt.f32.partialorder %v666, 0.0
    %v668 = vsel %vm667, 1, 0
    %v669 = vcvt.s32.f32 %v668
    %v671 = vsel %vm76, %v669, 0
    %673 = vmatpush.msra.mxu0 0.0
    %674 = vmatpush.msra.mxu0 0.0
    %675 = vmatpush.msra.mxu0 0.0
    %676 = vmatpush.msra.mxu0 0.0
    %677 = vmatpush.msra.mxu0 0.0
    %678 = vmatpush.msra.mxu0 0.0
    %679 = vmatpush.msra.mxu0 0.0
    %680 = vmatpush.msra.mxu0 0.0
    %681 = vmatpush.msra.mxu0 0.0
    %682 = vmatpush.msra.mxu0 0.0
    %683 = vmatpush.msra.mxu0 0.0
    %684 = vmatpush.msra.mxu0 0.0
    %685 = vmatpush.msra.mxu0 %v42
    %686 = vmatpush.msra.mxu0 %v41
    %687 = vmatpush.msra.mxu0 %v40
    %688 = vmatpush.msra.mxu0 %v39
    %689 = vmatmul.f32.gmra.mxu0 %v671
    %v690 = vpop.f32.mrf.mxu0
    %v691 = vadd.f32 %v44, %v690
    %692 = vdwg.mxu0
    %v693 = vmul.f32 %v46, %v525
    %v694 = vadd.f32 %v693, %v691
    %v695 = vmul.f32 %v48, %v529
    %v696 = vadd.f32 %v695, %v694
    %v697 = vmul.f32 %v533, %v50
    %v698 = vsub.f32 %v696, %v697
    %v699 = vsub.f32 %v698, %v50
    %vm700 = vcmp.gt.f32.partialorder %v699, 0.0
    %v701 = vsel %vm700, 1, 0
    %v702 = vcvt.s32.f32 %v701
    %v704 = vsel %vm76, %v702, 0
    %706 = vmatpush.msra.mxu0 0.0
    %707 = vmatpush.msra.mxu0 0.0
    %708 = vmatpush.msra.mxu0 0.0
    %709 = vmatpush.msra.mxu0 0.0
    %710 = vmatpush.msra.mxu0 0.0
    %711 = vmatpush.msra.mxu0 0.0
    %712 = vmatpush.msra.mxu0 0.0
    %713 = vmatpush.msra.mxu0 0.0
    %714 = vmatpush.msra.mxu0 0.0
    %715 = vmatpush.msra.mxu0 0.0
    %716 = vmatpush.msra.mxu0 0.0
    %717 = vmatpush.msra.mxu0 0.0
    %718 = vmatpush.msra.mxu0 %v54
    %719 = vmatpush.msra.mxu0 %v53
    %720 = vmatpush.msra.mxu0 %v52
    %721 = vmatpush.msra.mxu0 %v51
    %722 = vmatmul.f32.gmra.mxu0 %v704
    %v723 = vpop.f32.mrf.mxu0
    %v724 = vadd.f32 %v56, %v723
    %725 = vdwg.mxu0
    %v726 = vmul.f32 %v58, %v558
    %v727 = vadd.f32 %v726, %v724
    %v728 = vmul.f32 %v60, %v562
    %v729 = vadd.f32 %v728, %v727
    %v730 = vmul.f32 %v566, %v62
    %v731 = vsub.f32 %v729, %v730
    %v732 = vsub.f32 %v731, %v62
    %vm733 = vcmp.gt.f32.partialorder %v732, 0.0
    %v734 = vsel %vm733, 1, 0
    %v735 = vcvt.s32.f32 %v734
    %v737 = vsel %vm76, %v735, 0
    %739 = vmatpush.msra.mxu0 0.0
    %740 = vmatpush.msra.mxu0 0.0
    %741 = vmatpush.msra.mxu0 0.0
    %742 = vmatpush.msra.mxu0 0.0
    %743 = vmatpush.msra.mxu0 0.0
    %744 = vmatpush.msra.mxu0 0.0
    %745 = vmatpush.msra.mxu0 0.0
    %746 = vmatpush.msra.mxu0 0.0
    %747 = vmatpush.msra.mxu0 0.0
    %748 = vmatpush.msra.mxu0 0.0
    %749 = vmatpush.msra.mxu0 0.0
    %750 = vmatpush.msra.mxu0 0.0
    %751 = vmatpush.msra.mxu0 %v66
    %752 = vmatpush.msra.mxu0 %v65
    %753 = vmatpush.msra.mxu0 %v64
    %754 = vmatpush.msra.mxu0 %v63
    %755 = vmatmul.f32.gmra.mxu0 %v737
    %v756 = vpop.f32.mrf.mxu0
    %v757 = vadd.f32 %v68, %v756
    %758 = vdwg.mxu0
    %v759 = vmul.f32 %v70, %v591
    %v760 = vadd.f32 %v759, %v757
    %v761 = vmul.f32 %v72, %v595
    %v762 = vadd.f32 %v761, %v760
    %v763 = vmul.f32 %v599, %v74
    %v764 = vsub.f32 %v762, %v763
    %v765 = vsub.f32 %v764, %v74
    %vm766 = vcmp.gt.f32.partialorder %v765, 0.0
    %v767 = vsel %vm766, 1, 0
    %v768 = vcvt.s32.f32 %v767
    %s769 = scalar_lea.vmem [#allocation2], 6
    %770 = vst.msk [vmem:[%s769] sm:$0x3] %vm262, %v768
    %s771 = scalar_lea.vmem %s0, 8
    %v772 = vld [vmem:[%s771] sm:$0x3]
    %v774 = vsel %vm76, %v772, 0
    %776 = vmatpush.msra.mxu0 0.0
    %777 = vmatpush.msra.mxu0 0.0
    %778 = vmatpush.msra.mxu0 0.0
    %779 = vmatpush.msra.mxu0 0.0
    %780 = vmatpush.msra.mxu0 0.0
    %781 = vmatpush.msra.mxu0 0.0
    %782 = vmatpush.msra.mxu0 0.0
    %783 = vmatpush.msra.mxu0 0.0
    %784 = vmatpush.msra.mxu0 0.0
    %785 = vmatpush.msra.mxu0 0.0
    %786 = vmatpush.msra.mxu0 0.0
    %787 = vmatpush.msra.mxu0 0.0
    %788 = vmatpush.msra.mxu0 %v18
    %789 = vmatpush.msra.mxu0 %v17
    %790 = vmatpush.msra.mxu0 %v16
    %791 = vmatpush.msra.mxu0 %v15
    %792 = vmatmul.f32.gmra.mxu0 %v774
    %v793 = vpop.f32.mrf.mxu0
    %v794 = vadd.f32 %v20, %v793
    %795 = vdwg.mxu0
    %v796 = vmul.f32 %v22, %v628
    %v797 = vadd.f32 %v796, %v794
    %v798 = vmul.f32 %v24, %v632
    %v799 = vadd.f32 %v798, %v797
    %v800 = vmul.f32 %v636, %v26
    %v801 = vsub.f32 %v799, %v800
    %v802 = vsub.f32 %v801, %v26
    %vm803 = vcmp.gt.f32.partialorder %v802, 0.0
    %v804 = vsel %vm803, 1, 0
    %v805 = vcvt.s32.f32 %v804
    %v807 = vsel %vm76, %v805, 0
    %809 = vmatpush.msra.mxu0 0.0
    %810 = vmatpush.msra.mxu0 0.0
    %811 = vmatpush.msra.mxu0 0.0
    %812 = vmatpush.msra.mxu0 0.0
    %813 = vmatpush.msra.mxu0 0.0
    %814 = vmatpush.msra.mxu0 0.0
    %815 = vmatpush.msra.mxu0 0.0
    %816 = vmatpush.msra.mxu0 0.0
    %817 = vmatpush.msra.mxu0 0.0
    %818 = vmatpush.msra.mxu0 0.0
    %819 = vmatpush.msra.mxu0 0.0
    %820 = vmatpush.msra.mxu0 0.0
    %821 = vmatpush.msra.mxu0 %v30
    %822 = vmatpush.msra.mxu0 %v29
    %823 = vmatpush.msra.mxu0 %v28
    %824 = vmatpush.msra.mxu0 %v27
    %825 = vmatmul.f32.gmra.mxu0 %v807
    %v826 = vpop.f32.mrf.mxu0
    %v827 = vadd.f32 %v32, %v826
    %828 = vdwg.mxu0
    %v829 = vmul.f32 %v34, %v661
    %v830 = vadd.f32 %v829, %v827
    %v831 = vmul.f32 %v36, %v665
    %v832 = vadd.f32 %v831, %v830
    %v833 = vmul.f32 %v669, %v38
    %v834 = vsub.f32 %v832, %v833
    %v835 = vsub.f32 %v834, %v38
    %vm836 = vcmp.gt.f32.partialorder %v835, 0.0
    %v837 = vsel %vm836, 1, 0
    %v838 = vcvt.s32.f32 %v837
    %v840 = vsel %vm76, %v838, 0
    %842 = vmatpush.msra.mxu0 0.0
    %843 = vmatpush.msra.mxu0 0.0
    %844 = vmatpush.msra.mxu0 0.0
    %845 = vmatpush.msra.mxu0 0.0
    %846 = vmatpush.msra.mxu0 0.0
    %847 = vmatpush.msra.mxu0 0.0
    %848 = vmatpush.msra.mxu0 0.0
    %849 = vmatpush.msra.mxu0 0.0
    %850 = vmatpush.msra.mxu0 0.0
    %851 = vmatpush.msra.mxu0 0.0
    %852 = vmatpush.msra.mxu0 0.0
    %853 = vmatpush.msra.mxu0 0.0
    %854 = vmatpush.msra.mxu0 %v42
    %855 = vmatpush.msra.mxu0 %v41
    %856 = vmatpush.msra.mxu0 %v40
    %857 = vmatpush.msra.mxu0 %v39
    %858 = vmatmul.f32.gmra.mxu0 %v840
    %v859 = vpop.f32.mrf.mxu0
    %v860 = vadd.f32 %v44, %v859
    %861 = vdwg.mxu0
    %v862 = vmul.f32 %v46, %v694
    %v863 = vadd.f32 %v862, %v860
    %v864 = vmul.f32 %v48, %v698
    %v865 = vadd.f32 %v864, %v863
    %v866 = vmul.f32 %v702, %v50
    %v867 = vsub.f32 %v865, %v866
    %v868 = vsub.f32 %v867, %v50
    %vm869 = vcmp.gt.f32.partialorder %v868, 0.0
    %v870 = vsel %vm869, 1, 0
    %v871 = vcvt.s32.f32 %v870
    %v873 = vsel %vm76, %v871, 0
    %875 = vmatpush.msra.mxu0 0.0
    %876 = vmatpush.msra.mxu0 0.0
    %877 = vmatpush.msra.mxu0 0.0
    %878 = vmatpush.msra.mxu0 0.0
    %879 = vmatpush.msra.mxu0 0.0
    %880 = vmatpush.msra.mxu0 0.0
    %881 = vmatpush.msra.mxu0 0.0
    %882 = vmatpush.msra.mxu0 0.0
    %883 = vmatpush.msra.mxu0 0.0
    %884 = vmatpush.msra.mxu0 0.0
    %885 = vmatpush.msra.mxu0 0.0
    %886 = vmatpush.msra.mxu0 0.0
    %887 = vmatpush.msra.mxu0 %v54
    %888 = vmatpush.msra.mxu0 %v53
    %889 = vmatpush.msra.mxu0 %v52
    %890 = vmatpush.msra.mxu0 %v51
    %891 = vmatmul.f32.gmra.mxu0 %v873
    %v892 = vpop.f32.mrf.mxu0
    %v893 = vadd.f32 %v56, %v892
    %894 = vdwg.mxu0
    %v895 = vmul.f32 %v58, %v727
    %v896 = vadd.f32 %v895, %v893
    %v897 = vmul.f32 %v60, %v731
    %v898 = vadd.f32 %v897, %v896
    %v899 = vmul.f32 %v735, %v62
    %v900 = vsub.f32 %v898, %v899
    %v901 = vsub.f32 %v900, %v62
    %vm902 = vcmp.gt.f32.partialorder %v901, 0.0
    %v903 = vsel %vm902, 1, 0
    %v904 = vcvt.s32.f32 %v903
    %v906 = vsel %vm76, %v904, 0
    %908 = vmatpush.msra.mxu0 0.0
    %909 = vmatpush.msra.mxu0 0.0
    %910 = vmatpush.msra.mxu0 0.0
    %911 = vmatpush.msra.mxu0 0.0
    %912 = vmatpush.msra.mxu0 0.0
    %913 = vmatpush.msra.mxu0 0.0
    %914 = vmatpush.msra.mxu0 0.0
    %915 = vmatpush.msra.mxu0 0.0
    %916 = vmatpush.msra.mxu0 0.0
    %917 = vmatpush.msra.mxu0 0.0
    %918 = vmatpush.msra.mxu0 0.0
    %919 = vmatpush.msra.mxu0 0.0
    %920 = vmatpush.msra.mxu0 %v66
    %921 = vmatpush.msra.mxu0 %v65
    %922 = vmatpush.msra.mxu0 %v64
    %923 = vmatpush.msra.mxu0 %v63
    %924 = vmatmul.f32.gmra.mxu0 %v906
    %v925 = vpop.f32.mrf.mxu0
    %v926 = vadd.f32 %v68, %v925
    %927 = vdwg.mxu0
    %v928 = vmul.f32 %v70, %v760
    %v929 = vadd.f32 %v928, %v926
    %v930 = vmul.f32 %v72, %v764
    %v931 = vadd.f32 %v930, %v929
    %v932 = vmul.f32 %v768, %v74
    %v933 = vsub.f32 %v931, %v932
    %v934 = vsub.f32 %v933, %v74
    %vm935 = vcmp.gt.f32.partialorder %v934, 0.0
    %v936 = vsel %vm935, 1, 0
    %v937 = vcvt.s32.f32 %v936
    %s938 = scalar_lea.vmem [#allocation2], 8
    %939 = vst.msk [vmem:[%s938] sm:$0x3] %vm262, %v937
    %s940 = scalar_lea.vmem %s0, 10
    %v941 = vld [vmem:[%s940] sm:$0x3]
    %v943 = vsel %vm76, %v941, 0
    %945 = vmatpush.msra.mxu0 0.0
    %946 = vmatpush.msra.mxu0 0.0
    %947 = vmatpush.msra.mxu0 0.0
    %948 = vmatpush.msra.mxu0 0.0
    %949 = vmatpush.msra.mxu0 0.0
    %950 = vmatpush.msra.mxu0 0.0
    %951 = vmatpush.msra.mxu0 0.0
    %952 = vmatpush.msra.mxu0 0.0
    %953 = vmatpush.msra.mxu0 0.0
    %954 = vmatpush.msra.mxu0 0.0
    %955 = vmatpush.msra.mxu0 0.0
    %956 = vmatpush.msra.mxu0 0.0
    %957 = vmatpush.msra.mxu0 %v18
    %958 = vmatpush.msra.mxu0 %v17
    %959 = vmatpush.msra.mxu0 %v16
    %960 = vmatpush.msra.mxu0 %v15
    %961 = vmatmul.f32.gmra.mxu0 %v943
    %v962 = vpop.f32.mrf.mxu0
    %v963 = vadd.f32 %v20, %v962
    %964 = vdwg.mxu0
    %v965 = vmul.f32 %v22, %v797
    %v966 = vadd.f32 %v965, %v963
    %v967 = vmul.f32 %v24, %v801
    %v968 = vadd.f32 %v967, %v966
    %v969 = vmul.f32 %v805, %v26
    %v970 = vsub.f32 %v968, %v969
    %v971 = vsub.f32 %v970, %v26
    %vm972 = vcmp.gt.f32.partialorder %v971, 0.0
    %v973 = vsel %vm972, 1, 0
    %v974 = vcvt.s32.f32 %v973
    %v976 = vsel %vm76, %v974, 0
    %978 = vmatpush.msra.mxu0 0.0
    %979 = vmatpush.msra.mxu0 0.0
    %980 = vmatpush.msra.mxu0 0.0
    %981 = vmatpush.msra.mxu0 0.0
    %982 = vmatpush.msra.mxu0 0.0
    %983 = vmatpush.msra.mxu0 0.0
    %984 = vmatpush.msra.mxu0 0.0
    %985 = vmatpush.msra.mxu0 0.0
    %986 = vmatpush.msra.mxu0 0.0
    %987 = vmatpush.msra.mxu0 0.0
    %988 = vmatpush.msra.mxu0 0.0
    %989 = vmatpush.msra.mxu0 0.0
    %990 = vmatpush.msra.mxu0 %v30
    %991 = vmatpush.msra.mxu0 %v29
    %992 = vmatpush.msra.mxu0 %v28
    %993 = vmatpush.msra.mxu0 %v27
    %994 = vmatmul.f32.gmra.mxu0 %v976
    %v995 = vpop.f32.mrf.mxu0
    %v996 = vadd.f32 %v32, %v995
    %997 = vdwg.mxu0
    %v998 = vmul.f32 %v34, %v830
    %v999 = vadd.f32 %v998, %v996
    %v1000 = vmul.f32 %v36, %v834
    %v1001 = vadd.f32 %v1000, %v999
    %v1002 = vmul.f32 %v838, %v38
    %v1003 = vsub.f32 %v1001, %v1002
    %v1004 = vsub.f32 %v1003, %v38
    %vm1005 = vcmp.gt.f32.partialorder %v1004, 0.0
    %v1006 = vsel %vm1005, 1, 0
    %v1007 = vcvt.s32.f32 %v1006
    %v1009 = vsel %vm76, %v1007, 0
    %1011 = vmatpush.msra.mxu0 0.0
    %1012 = vmatpush.msra.mxu0 0.0
    %1013 = vmatpush.msra.mxu0 0.0
    %1014 = vmatpush.msra.mxu0 0.0
    %1015 = vmatpush.msra.mxu0 0.0
    %1016 = vmatpush.msra.mxu0 0.0
    %1017 = vmatpush.msra.mxu0 0.0
    %1018 = vmatpush.msra.mxu0 0.0
    %1019 = vmatpush.msra.mxu0 0.0
    %1020 = vmatpush.msra.mxu0 0.0
    %1021 = vmatpush.msra.mxu0 0.0
    %1022 = vmatpush.msra.mxu0 0.0
    %1023 = vmatpush.msra.mxu0 %v42
    %1024 = vmatpush.msra.mxu0 %v41
    %1025 = vmatpush.msra.mxu0 %v40
    %1026 = vmatpush.msra.mxu0 %v39
    %1027 = vmatmul.f32.gmra.mxu0 %v1009
    %v1028 = vpop.f32.mrf.mxu0
    %v1029 = vadd.f32 %v44, %v1028
    %1030 = vdwg.mxu0
    %v1031 = vmul.f32 %v46, %v863
    %v1032 = vadd.f32 %v1031, %v1029
    %v1033 = vmul.f32 %v48, %v867
    %v1034 = vadd.f32 %v1033, %v1032
    %v1035 = vmul.f32 %v871, %v50
    %v1036 = vsub.f32 %v1034, %v1035
    %v1037 = vsub.f32 %v1036, %v50
    %vm1038 = vcmp.gt.f32.partialorder %v1037, 0.0
    %v1039 = vsel %vm1038, 1, 0
    %v1040 = vcvt.s32.f32 %v1039
    %v1042 = vsel %vm76, %v1040, 0
    %1044 = vmatpush.msra.mxu0 0.0
    %1045 = vmatpush.msra.mxu0 0.0
    %1046 = vmatpush.msra.mxu0 0.0
    %1047 = vmatpush.msra.mxu0 0.0
    %1048 = vmatpush.msra.mxu0 0.0
    %1049 = vmatpush.msra.mxu0 0.0
    %1050 = vmatpush.msra.mxu0 0.0
    %1051 = vmatpush.msra.mxu0 0.0
    %1052 = vmatpush.msra.mxu0 0.0
    %1053 = vmatpush.msra.mxu0 0.0
    %1054 = vmatpush.msra.mxu0 0.0
    %1055 = vmatpush.msra.mxu0 0.0
    %1056 = vmatpush.msra.mxu0 %v54
    %1057 = vmatpush.msra.mxu0 %v53
    %1058 = vmatpush.msra.mxu0 %v52
    %1059 = vmatpush.msra.mxu0 %v51
    %1060 = vmatmul.f32.gmra.mxu0 %v1042
    %v1061 = vpop.f32.mrf.mxu0
    %v1062 = vadd.f32 %v56, %v1061
    %1063 = vdwg.mxu0
    %v1064 = vmul.f32 %v58, %v896
    %v1065 = vadd.f32 %v1064, %v1062
    %v1066 = vmul.f32 %v60, %v900
    %v1067 = vadd.f32 %v1066, %v1065
    %v1068 = vmul.f32 %v904, %v62
    %v1069 = vsub.f32 %v1067, %v1068
    %v1070 = vsub.f32 %v1069, %v62
    %vm1071 = vcmp.gt.f32.partialorder %v1070, 0.0
    %v1072 = vsel %vm1071, 1, 0
    %v1073 = vcvt.s32.f32 %v1072
    %v1075 = vsel %vm76, %v1073, 0
    %1077 = vmatpush.msra.mxu0 0.0
    %1078 = vmatpush.msra.mxu0 0.0
    %1079 = vmatpush.msra.mxu0 0.0
    %1080 = vmatpush.msra.mxu0 0.0
    %1081 = vmatpush.msra.mxu0 0.0
    %1082 = vmatpush.msra.mxu0 0.0
    %1083 = vmatpush.msra.mxu0 0.0
    %1084 = vmatpush.msra.mxu0 0.0
    %1085 = vmatpush.msra.mxu0 0.0
    %1086 = vmatpush.msra.mxu0 0.0
    %1087 = vmatpush.msra.mxu0 0.0
    %1088 = vmatpush.msra.mxu0 0.0
    %1089 = vmatpush.msra.mxu0 %v66
    %1090 = vmatpush.msra.mxu0 %v65
    %1091 = vmatpush.msra.mxu0 %v64
    %1092 = vmatpush.msra.mxu0 %v63
    %1093 = vmatmul.f32.gmra.mxu0 %v1075
    %v1094 = vpop.f32.mrf.mxu0
    %v1095 = vadd.f32 %v68, %v1094
    %1096 = vdwg.mxu0
    %v1097 = vmul.f32 %v70, %v929
    %v1098 = vadd.f32 %v1097, %v1095
    %v1099 = vmul.f32 %v72, %v933
    %v1100 = vadd.f32 %v1099, %v1098
    %v1101 = vmul.f32 %v937, %v74
    %v1102 = vsub.f32 %v1100, %v1101
    %v1103 = vsub.f32 %v1102, %v74
    %vm1104 = vcmp.gt.f32.partialorder %v1103, 0.0
    %v1105 = vsel %vm1104, 1, 0
    %v1106 = vcvt.s32.f32 %v1105
    %s1107 = scalar_lea.vmem [#allocation2], 10
    %1108 = vst.msk [vmem:[%s1107] sm:$0x3] %vm262, %v1106
    %s1109 = scalar_lea.vmem %s0, 12
    %v1110 = vld [vmem:[%s1109] sm:$0x3]
    %v1112 = vsel %vm76, %v1110, 0
    %1114 = vmatpush.msra.mxu0 0.0
    %1115 = vmatpush.msra.mxu0 0.0
    %1116 = vmatpush.msra.mxu0 0.0
    %1117 = vmatpush.msra.mxu0 0.0
    %1118 = vmatpush.msra.mxu0 0.0
    %1119 = vmatpush.msra.mxu0 0.0
    %1120 = vmatpush.msra.mxu0 0.0
    %1121 = vmatpush.msra.mxu0 0.0
    %1122 = vmatpush.msra.mxu0 0.0
    %1123 = vmatpush.msra.mxu0 0.0
    %1124 = vmatpush.msra.mxu0 0.0
    %1125 = vmatpush.msra.mxu0 0.0
    %1126 = vmatpush.msra.mxu0 %v18
    %1127 = vmatpush.msra.mxu0 %v17
    %1128 = vmatpush.msra.mxu0 %v16
    %1129 = vmatpush.msra.mxu0 %v15
    %1130 = vmatmul.f32.gmra.mxu0 %v1112
    %v1131 = vpop.f32.mrf.mxu0
    %v1132 = vadd.f32 %v20, %v1131
    %1133 = vdwg.mxu0
    %v1134 = vmul.f32 %v22, %v966
    %v1135 = vadd.f32 %v1134, %v1132
    %v1136 = vmul.f32 %v24, %v970
    %v1137 = vadd.f32 %v1136, %v1135
    %v1138 = vmul.f32 %v974, %v26
    %v1139 = vsub.f32 %v1137, %v1138
    %v1140 = vsub.f32 %v1139, %v26
    %vm1141 = vcmp.gt.f32.partialorder %v1140, 0.0
    %v1142 = vsel %vm1141, 1, 0
    %v1143 = vcvt.s32.f32 %v1142
    %v1145 = vsel %vm76, %v1143, 0
    %1147 = vmatpush.msra.mxu0 0.0
    %1148 = vmatpush.msra.mxu0 0.0
    %1149 = vmatpush.msra.mxu0 0.0
    %1150 = vmatpush.msra.mxu0 0.0
    %1151 = vmatpush.msra.mxu0 0.0
    %1152 = vmatpush.msra.mxu0 0.0
    %1153 = vmatpush.msra.mxu0 0.0
    %1154 = vmatpush.msra.mxu0 0.0
    %1155 = vmatpush.msra.mxu0 0.0
    %1156 = vmatpush.msra.mxu0 0.0
    %1157 = vmatpush.msra.mxu0 0.0
    %1158 = vmatpush.msra.mxu0 0.0
    %1159 = vmatpush.msra.mxu0 %v30
    %1160 = vmatpush.msra.mxu0 %v29
    %1161 = vmatpush.msra.mxu0 %v28
    %1162 = vmatpush.msra.mxu0 %v27
    %1163 = vmatmul.f32.gmra.mxu0 %v1145
    %v1164 = vpop.f32.mrf.mxu0
    %v1165 = vadd.f32 %v32, %v1164
    %1166 = vdwg.mxu0
    %v1167 = vmul.f32 %v34, %v999
    %v1168 = vadd.f32 %v1167, %v1165
    %v1169 = vmul.f32 %v36, %v1003
    %v1170 = vadd.f32 %v1169, %v1168
    %v1171 = vmul.f32 %v1007, %v38
    %v1172 = vsub.f32 %v1170, %v1171
    %v1173 = vsub.f32 %v1172, %v38
    %vm1174 = vcmp.gt.f32.partialorder %v1173, 0.0
    %v1175 = vsel %vm1174, 1, 0
    %v1176 = vcvt.s32.f32 %v1175
    %v1178 = vsel %vm76, %v1176, 0
    %1180 = vmatpush.msra.mxu0 0.0
    %1181 = vmatpush.msra.mxu0 0.0
    %1182 = vmatpush.msra.mxu0 0.0
    %1183 = vmatpush.msra.mxu0 0.0
    %1184 = vmatpush.msra.mxu0 0.0
    %1185 = vmatpush.msra.mxu0 0.0
    %1186 = vmatpush.msra.mxu0 0.0
    %1187 = vmatpush.msra.mxu0 0.0
    %1188 = vmatpush.msra.mxu0 0.0
    %1189 = vmatpush.msra.mxu0 0.0
    %1190 = vmatpush.msra.mxu0 0.0
    %1191 = vmatpush.msra.mxu0 0.0
    %1192 = vmatpush.msra.mxu0 %v42
    %1193 = vmatpush.msra.mxu0 %v41
    %1194 = vmatpush.msra.mxu0 %v40
    %1195 = vmatpush.msra.mxu0 %v39
    %1196 = vmatmul.f32.gmra.mxu0 %v1178
    %v1197 = vpop.f32.mrf.mxu0
    %v1198 = vadd.f32 %v44, %v1197
    %1199 = vdwg.mxu0
    %v1200 = vmul.f32 %v46, %v1032
    %v1201 = vadd.f32 %v1200, %v1198
    %v1202 = vmul.f32 %v48, %v1036
    %v1203 = vadd.f32 %v1202, %v1201
    %v1204 = vmul.f32 %v1040, %v50
    %v1205 = vsub.f32 %v1203, %v1204
    %v1206 = vsub.f32 %v1205, %v50
    %vm1207 = vcmp.gt.f32.partialorder %v1206, 0.0
    %v1208 = vsel %vm1207, 1, 0
    %v1209 = vcvt.s32.f32 %v1208
    %v1211 = vsel %vm76, %v1209, 0
    %1213 = vmatpush.msra.mxu0 0.0
    %1214 = vmatpush.msra.mxu0 0.0
    %1215 = vmatpush.msra.mxu0 0.0
    %1216 = vmatpush.msra.mxu0 0.0
    %1217 = vmatpush.msra.mxu0 0.0
    %1218 = vmatpush.msra.mxu0 0.0
    %1219 = vmatpush.msra.mxu0 0.0
    %1220 = vmatpush.msra.mxu0 0.0
    %1221 = vmatpush.msra.mxu0 0.0
    %1222 = vmatpush.msra.mxu0 0.0
    %1223 = vmatpush.msra.mxu0 0.0
    %1224 = vmatpush.msra.mxu0 0.0
    %1225 = vmatpush.msra.mxu0 %v54
    %1226 = vmatpush.msra.mxu0 %v53
    %1227 = vmatpush.msra.mxu0 %v52
    %1228 = vmatpush.msra.mxu0 %v51
    %1229 = vmatmul.f32.gmra.mxu0 %v1211
    %v1230 = vpop.f32.mrf.mxu0
    %v1231 = vadd.f32 %v56, %v1230
    %1232 = vdwg.mxu0
    %v1233 = vmul.f32 %v58, %v1065
    %v1234 = vadd.f32 %v1233, %v1231
    %v1235 = vmul.f32 %v60, %v1069
    %v1236 = vadd.f32 %v1235, %v1234
    %v1237 = vmul.f32 %v1073, %v62
    %v1238 = vsub.f32 %v1236, %v1237
    %v1239 = vsub.f32 %v1238, %v62
    %vm1240 = vcmp.gt.f32.partialorder %v1239, 0.0
    %v1241 = vsel %vm1240, 1, 0
    %v1242 = vcvt.s32.f32 %v1241
    %v1244 = vsel %vm76, %v1242, 0
    %1246 = vmatpush.msra.mxu0 0.0
    %1247 = vmatpush.msra.mxu0 0.0
    %1248 = vmatpush.msra.mxu0 0.0
    %1249 = vmatpush.msra.mxu0 0.0
    %1250 = vmatpush.msra.mxu0 0.0
    %1251 = vmatpush.msra.mxu0 0.0
    %1252 = vmatpush.msra.mxu0 0.0
    %1253 = vmatpush.msra.mxu0 0.0
    %1254 = vmatpush.msra.mxu0 0.0
    %1255 = vmatpush.msra.mxu0 0.0
    %1256 = vmatpush.msra.mxu0 0.0
    %1257 = vmatpush.msra.mxu0 0.0
    %1258 = vmatpush.msra.mxu0 %v66
    %1259 = vmatpush.msra.mxu0 %v65
    %1260 = vmatpush.msra.mxu0 %v64
    %1261 = vmatpush.msra.mxu0 %v63
    %1262 = vmatmul.f32.gmra.mxu0 %v1244
    %v1263 = vpop.f32.mrf.mxu0
    %v1264 = vadd.f32 %v68, %v1263
    %1265 = vdwg.mxu0
    %v1266 = vmul.f32 %v70, %v1098
    %v1267 = vadd.f32 %v1266, %v1264
    %v1268 = vmul.f32 %v72, %v1102
    %v1269 = vadd.f32 %v1268, %v1267
    %v1270 = vmul.f32 %v1106, %v74
    %v1271 = vsub.f32 %v1269, %v1270
    %v1272 = vsub.f32 %v1271, %v74
    %vm1273 = vcmp.gt.f32.partialorder %v1272, 0.0
    %v1274 = vsel %vm1273, 1, 0
    %v1275 = vcvt.s32.f32 %v1274
    %s1276 = scalar_lea.vmem [#allocation2], 12
    %1277 = vst.msk [vmem:[%s1276] sm:$0x3] %vm262, %v1275
    %s1278 = scalar_lea.vmem %s0, 14
    %v1279 = vld [vmem:[%s1278] sm:$0x3]
    %v1281 = vsel %vm76, %v1279, 0
    %1283 = vmatpush.msra.mxu0 0.0
    %1284 = vmatpush.msra.mxu0 0.0
    %1285 = vmatpush.msra.mxu0 0.0
    %1286 = vmatpush.msra.mxu0 0.0
    %1287 = vmatpush.msra.mxu0 0.0
    %1288 = vmatpush.msra.mxu0 0.0
    %1289 = vmatpush.msra.mxu0 0.0
    %1290 = vmatpush.msra.mxu0 0.0
    %1291 = vmatpush.msra.mxu0 0.0
    %1292 = vmatpush.msra.mxu0 0.0
    %1293 = vmatpush.msra.mxu0 0.0
    %1294 = vmatpush.msra.mxu0 0.0
    %1295 = vmatpush.msra.mxu0 %v18
    %1296 = vmatpush.msra.mxu0 %v17
    %1297 = vmatpush.msra.mxu0 %v16
    %1298 = vmatpush.msra.mxu0 %v15
    %1299 = vmatmul.f32.gmra.mxu0 %v1281
    %v1300 = vpop.f32.mrf.mxu0
    %v1301 = vadd.f32 %v20, %v1300
    %1302 = vdwg.mxu0
    %v1303 = vmul.f32 %v22, %v1135
    %v1304 = vadd.f32 %v1303, %v1301
    %v1305 = vmul.f32 %v24, %v1139
    %v1306 = vadd.f32 %v1305, %v1304
    %v1307 = vmul.f32 %v1143, %v26
    %v1308 = vsub.f32 %v1306, %v1307
    %v1309 = vsub.f32 %v1308, %v26
    %vm1310 = vcmp.gt.f32.partialorder %v1309, 0.0
    %v1311 = vsel %vm1310, 1, 0
    %v1312 = vcvt.s32.f32 %v1311
    %v1314 = vsel %vm76, %v1312, 0
    %1316 = vmatpush.msra.mxu0 0.0
    %1317 = vmatpush.msra.mxu0 0.0
    %1318 = vmatpush.msra.mxu0 0.0
    %1319 = vmatpush.msra.mxu0 0.0
    %1320 = vmatpush.msra.mxu0 0.0
    %1321 = vmatpush.msra.mxu0 0.0
    %1322 = vmatpush.msra.mxu0 0.0
    %1323 = vmatpush.msra.mxu0 0.0
    %1324 = vmatpush.msra.mxu0 0.0
    %1325 = vmatpush.msra.mxu0 0.0
    %1326 = vmatpush.msra.mxu0 0.0
    %1327 = vmatpush.msra.mxu0 0.0
    %1328 = vmatpush.msra.mxu0 %v30
    %1329 = vmatpush.msra.mxu0 %v29
    %1330 = vmatpush.msra.mxu0 %v28
    %1331 = vmatpush.msra.mxu0 %v27
    %1332 = vmatmul.f32.gmra.mxu0 %v1314
    %v1333 = vpop.f32.mrf.mxu0
    %v1334 = vadd.f32 %v32, %v1333
    %1335 = vdwg.mxu0
    %v1336 = vmul.f32 %v34, %v1168
    %v1337 = vadd.f32 %v1336, %v1334
    %v1338 = vmul.f32 %v36, %v1172
    %v1339 = vadd.f32 %v1338, %v1337
    %v1340 = vmul.f32 %v1176, %v38
    %v1341 = vsub.f32 %v1339, %v1340
    %v1342 = vsub.f32 %v1341, %v38
    %vm1343 = vcmp.gt.f32.partialorder %v1342, 0.0
    %v1344 = vsel %vm1343, 1, 0
    %v1345 = vcvt.s32.f32 %v1344
    %v1347 = vsel %vm76, %v1345, 0
    %1349 = vmatpush.msra.mxu0 0.0
    %1350 = vmatpush.msra.mxu0 0.0
    %1351 = vmatpush.msra.mxu0 0.0
    %1352 = vmatpush.msra.mxu0 0.0
    %1353 = vmatpush.msra.mxu0 0.0
    %1354 = vmatpush.msra.mxu0 0.0
    %1355 = vmatpush.msra.mxu0 0.0
    %1356 = vmatpush.msra.mxu0 0.0
    %1357 = vmatpush.msra.mxu0 0.0
    %1358 = vmatpush.msra.mxu0 0.0
    %1359 = vmatpush.msra.mxu0 0.0
    %1360 = vmatpush.msra.mxu0 0.0
    %1361 = vmatpush.msra.mxu0 %v42
    %1362 = vmatpush.msra.mxu0 %v41
    %1363 = vmatpush.msra.mxu0 %v40
    %1364 = vmatpush.msra.mxu0 %v39
    %1365 = vmatmul.f32.gmra.mxu0 %v1347
    %v1366 = vpop.f32.mrf.mxu0
    %v1367 = vadd.f32 %v44, %v1366
    %1368 = vdwg.mxu0
    %v1369 = vmul.f32 %v46, %v1201
    %v1370 = vadd.f32 %v1369, %v1367
    %v1371 = vmul.f32 %v48, %v1205
    %v1372 = vadd.f32 %v1371, %v1370
    %v1373 = vmul.f32 %v1209, %v50
    %v1374 = vsub.f32 %v1372, %v1373
    %v1375 = vsub.f32 %v1374, %v50
    %vm1376 = vcmp.gt.f32.partialorder %v1375, 0.0
    %v1377 = vsel %vm1376, 1, 0
    %v1378 = vcvt.s32.f32 %v1377
    %v1380 = vsel %vm76, %v1378, 0
    %1382 = vmatpush.msra.mxu0 0.0
    %1383 = vmatpush.msra.mxu0 0.0
    %1384 = vmatpush.msra.mxu0 0.0
    %1385 = vmatpush.msra.mxu0 0.0
    %1386 = vmatpush.msra.mxu0 0.0
    %1387 = vmatpush.msra.mxu0 0.0
    %1388 = vmatpush.msra.mxu0 0.0
    %1389 = vmatpush.msra.mxu0 0.0
    %1390 = vmatpush.msra.mxu0 0.0
    %1391 = vmatpush.msra.mxu0 0.0
    %1392 = vmatpush.msra.mxu0 0.0
    %1393 = vmatpush.msra.mxu0 0.0
    %1394 = vmatpush.msra.mxu0 %v54
    %1395 = vmatpush.msra.mxu0 %v53
    %1396 = vmatpush.msra.mxu0 %v52
    %1397 = vmatpush.msra.mxu0 %v51
    %1398 = vmatmul.f32.gmra.mxu0 %v1380
    %v1399 = vpop.f32.mrf.mxu0
    %v1400 = vadd.f32 %v56, %v1399
    %1401 = vdwg.mxu0
    %v1402 = vmul.f32 %v58, %v1234
    %v1403 = vadd.f32 %v1402, %v1400
    %v1404 = vmul.f32 %v60, %v1238
    %v1405 = vadd.f32 %v1404, %v1403
    %v1406 = vmul.f32 %v1242, %v62
    %v1407 = vsub.f32 %v1405, %v1406
    %v1408 = vsub.f32 %v1407, %v62
    %vm1409 = vcmp.gt.f32.partialorder %v1408, 0.0
    %v1410 = vsel %vm1409, 1, 0
    %v1411 = vcvt.s32.f32 %v1410
    %v1413 = vsel %vm76, %v1411, 0
    %1415 = vmatpush.msra.mxu0 0.0
    %1416 = vmatpush.msra.mxu0 0.0
    %1417 = vmatpush.msra.mxu0 0.0
    %1418 = vmatpush.msra.mxu0 0.0
    %1419 = vmatpush.msra.mxu0 0.0
    %1420 = vmatpush.msra.mxu0 0.0
    %1421 = vmatpush.msra.mxu0 0.0
    %1422 = vmatpush.msra.mxu0 0.0
    %1423 = vmatpush.msra.mxu0 0.0
    %1424 = vmatpush.msra.mxu0 0.0
    %1425 = vmatpush.msra.mxu0 0.0
    %1426 = vmatpush.msra.mxu0 0.0
    %1427 = vmatpush.msra.mxu0 %v66
    %1428 = vmatpush.msra.mxu0 %v65
    %1429 = vmatpush.msra.mxu0 %v64
    %1430 = vmatpush.msra.mxu0 %v63
    %1431 = vmatmul.f32.gmra.mxu0 %v1413
    %v1432 = vpop.f32.mrf.mxu0
    %v1433 = vadd.f32 %v68, %v1432
    %1434 = vdwg.mxu0
    %v1435 = vmul.f32 %v70, %v1267
    %v1436 = vadd.f32 %v1435, %v1433
    %v1437 = vmul.f32 %v72, %v1271
    %v1438 = vadd.f32 %v1437, %v1436
    %v1439 = vmul.f32 %v1275, %v74
    %v1440 = vsub.f32 %v1438, %v1439
    %v1441 = vsub.f32 %v1440, %v74
    %vm1442 = vcmp.gt.f32.partialorder %v1441, 0.0
    %v1443 = vsel %vm1442, 1, 0
    %v1444 = vcvt.s32.f32 %v1443
    %s1445 = scalar_lea.vmem [#allocation2], 14
    %1446 = vst.msk [vmem:[%s1445] sm:$0x3] %vm262, %v1444
    // Predicated region
    $region14: #{rdl_snn_synaptic_forward.1} parent=1 // pred_check
      _
    $region15: #{rdl_snn_synaptic_forward.1} parent=1 // pred_check_branch
      %1448 = sbr.rel (0) target = $region17
    $region16: #{rdl_snn_synaptic_forward.1} parent=1 // pred_region
      %1450 = vsyncadd [#allocation3], 0
      %s1451 = sshll.u32 [#allocation2], 4
      %s1452 = int_to_ptr.vmem [resolvable:$true] %s1451
      %s1453 = sshll.u32 %s3, 4
      %s1454 = int_to_ptr.hbm [resolvable:$true] %s1453
      %1459 = dma.vmem_to_hbm [thread:$0]  %s1452, 256, %s1454, [#allocation3], 32, 32, 2
    $region17: #{rdl_snn_synaptic_forward.1} parent=1 // pred_fallthru
      _
    // Predicated region
    $region18: #{rdl_snn_synaptic_forward.1} parent=1 // pred_check
      _
    $region19: #{rdl_snn_synaptic_forward.1} parent=1 // pred_check_branch
      %1461 = sbr.rel (0) target = $region21
    $region20: #{rdl_snn_synaptic_forward.1} parent=1 // pred_region
      %1463 = dma.done [#allocation3], 256
    $region21: #{rdl_snn_synaptic_forward.1} parent=1 // pred_fallthru
      _
    %1464 = vsyncpa [#allocation3], 1

</llo_original>
